<compile_context>
chip_gen: v6e
topology: v6e:2x2x1
jax: 0.10.0
libtpu: 0.0.40
codegen_flags: <defaults>
</compile_context>

<pallas_src>
import functools

import jax
import jax.numpy as jnp
import numpy as np
from jax.experimental import pallas as pl
from jax.experimental.pallas import tpu as pltpu


# ---------------------------------------------------------------------------
# Fused Pallas kernel: 8-tap trilinear blend + MIP render along all 3 axes
# ---------------------------------------------------------------------------
def _blend_render_kernel(taps_ref, w_ref, out_d_ref, out_h_ref, out_w_ref,
                         *, B, tz, H, W):
    """taps_ref: [B, 8, tz, H*W], w_ref: [8, tz, H*W] (lane-dense f32)."""
    # 8-tap trilinear blend (pure VPU elementwise, statically unrolled).
    rot = taps_ref[:, 0].astype(jnp.float32) * w_ref[0][None]
    for t in range(1, 8):
        rot = rot + taps_ref[:, t].astype(jnp.float32) * w_ref[t][None]
    # rot: [B, tz, H*W]

    # D-axis projection: per-tile partial max (finished by a tiny XLA max over
    # the grid tiles in the wrapper) -> every grid step is independent and the
    # grid axis can be marked "parallel" (megacore-safe on v7x).
    out_d_ref[...] = jnp.max(rot, axis=1)[None]                # [1, B, H*W]

    # Single relayout of the blended slab for the two directional reductions;
    # results are stored lane-dense ([B, tz*W] / [B, tz*H], >=128-wide rows).
    rot4 = rot.reshape(B, tz, H, W)
    out_h_ref[...] = jnp.max(rot4, axis=2).reshape(B, tz * W)  # max over H
    out_w_ref[...] = jnp.max(rot4, axis=3).reshape(B, tz * H)  # max over W


def _vmem_capacity_bytes():
    try:
        return int(pltpu.get_tpu_info().vmem_capacity_bytes)
    except Exception:
        return 64 * 1024 * 1024            # conservative default (v7x per-TC)


def _pick_tz(B, D, H, W, taps_itemsize, budget_bytes):
    """Largest D-tile whose pipelined footprint fits the VMEM budget."""
    HW = H * W

    def step_bytes(tz):
        taps_blk = B * 8 * tz * HW * taps_itemsize
        w_blk = 8 * tz * HW * 4
        outs = B * HW * 4 + B * tz * (H + W) * 4
        work = 3 * B * tz * HW * 4          # blended slab + relayout headroom
        return 2 * (taps_blk + w_blk) + work + outs   # x2 = double-buffering

    if step_bytes(D) <= budget_bytes:
        return D                            # whole depth in one step, grid=(1,)

    def legal(tz):                          # (8,128) tiling constraints
        return (D % tz == 0 and tz % 8 == 0
                and (tz * W) % 128 == 0 and (tz * H) % 128 == 0)

    cands = sorted((t for t in range(8, D, 8) if legal(t)), reverse=True)
    for tz in cands:
        if step_bytes(tz) <= budget_bytes:
            return tz
    return cands[-1] if cands else D        # smallest legal tile / fallback


def blend_and_render(taps, weights, H, W, *, tz=None):
    """taps: [B, 8, D, H*W], weights: [8, D, H*W] ->
       (max over D [B, H*W], max over H [B, D*W], max over W [B, D*H])."""
    B, _, D, HW = taps.shape
    assert HW == H * W
    cap = _vmem_capacity_bytes()
    if tz is None:
        tz = _pick_tz(B, D, H, W, taps.dtype.itemsize, budget_bytes=cap // 2)
    assert D % tz == 0, "D tile must divide D (pad D otherwise)"
    T = D // tz

    out_d_part, out_h, out_w = pl.pallas_call(
        functools.partial(_blend_render_kernel, B=B, tz=tz, H=H, W=W),
        out_shape=(
            jax.ShapeDtypeStruct((T, B, HW), jnp.float32),    # partial max over D
            jax.ShapeDtypeStruct((B, D * W), jnp.float32),    # max over H
            jax.ShapeDtypeStruct((B, D * H), jnp.float32),    # max over W
        ),
        grid=(T,),
        in_specs=[
            pl.BlockSpec((B, 8, tz, HW), lambda i: (0, 0, i, 0)),
            pl.BlockSpec((8, tz, HW), lambda i: (0, i, 0)),
        ],
        out_specs=(
            pl.BlockSpec((1, B, HW), lambda i: (i, 0, 0)),
            pl.BlockSpec((B, tz * W), lambda i: (0, i)),
            pl.BlockSpec((B, tz * H), lambda i: (0, i)),
        ),
        compiler_params=pltpu.CompilerParams(
            dimension_semantics=("parallel",),
            vmem_limit_bytes=int(min(cap, 128 * 1024 * 1024) * 0.9),
        ),
    )(taps, weights)

    out_d = jnp.max(out_d_part, axis=0)     # finish the D projection (tiny)
    return out_d, out_h, out_w


# ---------------------------------------------------------------------------
# Plain-JAX glue: deterministic random rotation + sparse 8-tap trilinear build
# ---------------------------------------------------------------------------
def _rotation_matrix(key):
    a, b, c = jax.random.uniform(
        key, (3,), dtype=jnp.float32, minval=0.0, maxval=2.0 * jnp.pi
    )
    ca, sa = jnp.cos(a), jnp.sin(a)
    cb, sb = jnp.cos(b), jnp.sin(b)
    cc, sc = jnp.cos(c), jnp.sin(c)
    rz = jnp.array([[ca, -sa, 0.0], [sa, ca, 0.0], [0.0, 0.0, 1.0]], jnp.float32)
    ry = jnp.array([[cb, 0.0, sb], [0.0, 1.0, 0.0], [-sb, 0.0, cb]], jnp.float32)
    rx = jnp.array([[1.0, 0.0, 0.0], [0.0, cc, -sc], [0.0, sc, cc]], jnp.float32)
    return rz @ ry @ rx


def _trilinear_taps(N, R):
    """Per-destination-voxel 8 source flat indices [8, N^3] (int32) and
    weights [8, N^3] (f32).  grid_sample convention (align_corners=False),
    zero padding outside the cube expressed via zeroed weights."""
    coords = (jnp.arange(N, dtype=jnp.float32) + 0.5) / N * 2.0 - 1.0
    zz, yy, xx = jnp.meshgrid(coords, coords, coords, indexing="ij")
    dst = jnp.stack([zz.ravel(), yy.ravel(), xx.ravel()], axis=0)   # [3, M]
    src = R.T @ dst                                                 # inverse rotation
    src_idx = (src + 1.0) * 0.5 * N - 0.5                           # voxel coords
    f = jnp.floor(src_idx)
    frac = src_idx - f
    idx_list, w_list = [], []
    for dz in (0, 1):
        for dy in (0, 1):
            for dx in (0, 1):
                zi = f[0] + dz
                yi = f[1] + dy
                xi = f[2] + dx
                w = (
                    (frac[0] if dz else 1.0 - frac[0])
                    * (frac[1] if dy else 1.0 - frac[1])
                    * (frac[2] if dx else 1.0 - frac[2])
                )
                valid = (
                    (zi >= 0) & (zi < N) & (yi >= 0) & (yi < N)
                    & (xi >= 0) & (xi < N)
                )
                zi_c = jnp.clip(zi, 0, N - 1).astype(jnp.int32)
                yi_c = jnp.clip(yi, 0, N - 1).astype(jnp.int32)
                xi_c = jnp.clip(xi, 0, N - 1).astype(jnp.int32)
                idx_list.append((zi_c * N + yi_c) * N + xi_c)
                w_list.append(jnp.where(valid, w, 0.0).astype(jnp.float32))
    return jnp.stack(idx_list, axis=0), jnp.stack(w_list, axis=0)


def baseline_renderer_forward(volume, key, *, taps_dtype=jnp.float32):
    """volume: [B, N, N, N] f32 -> [3B, 3, N, N] f32.
    (The reference's .double() is applied host-side by the caller.)"""
    B, N = volume.shape[0], volume.shape[1]
    assert volume.shape[1] == volume.shape[2] == volume.shape[3], (
        "torch.cat(dim=0) of the 3 projections requires a cube"
    )
    D = H = W = N

    R = _rotation_matrix(key)
    idx, w = _trilinear_taps(N, R)                        # [8, N^3] each

    vol_flat = volume.reshape(B, -1).astype(jnp.float32)  # [B, N^3]
    # Sparse rotation: gather the 8 trilinear taps once (XLA gather) and keep
    # them in their natural [B, 8, ...] order -> no transpose, the dominant
    # 8*B*N^3 stream is written and read exactly once.
    taps = jnp.take(vol_flat, idx, axis=1)                # [B, 8, N^3]
    taps = taps.reshape(B, 8, D, H * W).astype(taps_dtype)  # lane-dense view
    weights = w.reshape(8, D, H * W)

    # Fused blend + MIP render (single Pallas kernel, tiled over D).
    out_d, out_h, out_w = blend_and_render(taps, weights, H, W)

    out_d = out_d.reshape(B, H, W)                        # render along D
    out_h = out_h.reshape(B, D, W)                        # render along H
    out_w = out_w.reshape(B, D, H)                        # render along W

    # torch.cat(outputs, dim=0); .unsqueeze(1).expand(-1, 3, -1, -1)
    stacked = jnp.concatenate([out_d, out_h, out_w], axis=0)     # [3B, N, N]
    return jnp.broadcast_to(stacked[:, None, :, :], (3 * B, 3, N, N))


if __name__ == "__main__":
    key = jax.random.PRNGKey(0)
    k_vol, k_rot = jax.random.split(key)
    B, N = 2, 16
    volume = jax.random.normal(k_vol, (B, N, N, N), dtype=jnp.float32)

    out = baseline_renderer_forward(volume, k_rot)
    jax.block_until_ready(out)

    # Reference module's final .double(): TPUs have no native f64, so the cast
    # happens on host (numpy) once the f32 device result is ready.
    out64 = np.asarray(jax.device_get(out), dtype=np.float64)

    assert out.shape == (3 * B, 3, N, N), out.shape
    assert out64.dtype == np.float64, out64.dtype
    print("KERNEL_OK")
</pallas_src>

<mosaic_0001>
module attributes {stable_mosaic.version = 11 : i64} {
  func.func @_blend_render_kernel(%arg0: i32, %arg1: memref<2x8x16x256xf32, #tpu.memory_space<vmem>>, %arg2: memref<8x16x256xf32, #tpu.memory_space<vmem>>, %arg3: memref<1x2x256xf32, #tpu.memory_space<vmem>>, %arg4: memref<2x256xf32, #tpu.memory_space<vmem>>, %arg5: memref<2x256xf32, #tpu.memory_space<vmem>>) attributes {dimension_semantics = [#tpu.dimension_semantics<parallel>], iteration_bounds = array<i64: 1>, scalar_prefetch = 0 : i64, scratch_operands = 0 : i64, tpu.core_type = #tpu.core_type<tc>, window_params = [{transform_indices = @transform_0, window_bounds = array<i64: 2, 8, 16, 256>}, {transform_indices = @transform_1, window_bounds = array<i64: 8, 16, 256>}, {transform_indices = @transform_2, window_bounds = array<i64: 1, 2, 256>}, {transform_indices = @transform_3, window_bounds = array<i64: 2, 256>}, {transform_indices = @transform_4, window_bounds = array<i64: 2, 256>}]} {
    %c0 = arith.constant 0 : index
    %c0_0 = arith.constant 0 : index
    %c0_1 = arith.constant 0 : index
    %c0_2 = arith.constant 0 : index
    %0 = vector.load %arg1[%c0, %c0_0, %c0_1, %c0_2] : memref<2x8x16x256xf32, #tpu.memory_space<vmem>>, vector<2x1x16x256xf32>
    %1 = vector.shape_cast %0 : vector<2x1x16x256xf32> to vector<2x16x256xf32>
    %c0_3 = arith.constant 0 : index
    %c0_4 = arith.constant 0 : index
    %c0_5 = arith.constant 0 : index
    %2 = vector.load %arg2[%c0_3, %c0_4, %c0_5] : memref<8x16x256xf32, #tpu.memory_space<vmem>>, vector<1x16x256xf32>
    %3 = vector.shape_cast %2 : vector<1x16x256xf32> to vector<16x256xf32>
    %4 = vector.shape_cast %3 : vector<16x256xf32> to vector<1x16x256xf32>
    %5 = vector.broadcast %4 : vector<1x16x256xf32> to vector<2x16x256xf32>
    %6 = arith.mulf %1, %5 : vector<2x16x256xf32>
    %c0_6 = arith.constant 0 : index
    %c1 = arith.constant 1 : index
    %c0_7 = arith.constant 0 : index
    %c0_8 = arith.constant 0 : index
    %7 = vector.load %arg1[%c0_6, %c1, %c0_7, %c0_8] : memref<2x8x16x256xf32, #tpu.memory_space<vmem>>, vector<2x1x16x256xf32>
    %8 = vector.shape_cast %7 : vector<2x1x16x256xf32> to vector<2x16x256xf32>
    %c1_9 = arith.constant 1 : index
    %c0_10 = arith.constant 0 : index
    %c0_11 = arith.constant 0 : index
    %9 = vector.load %arg2[%c1_9, %c0_10, %c0_11] : memref<8x16x256xf32, #tpu.memory_space<vmem>>, vector<1x16x256xf32>
    %10 = vector.shape_cast %9 : vector<1x16x256xf32> to vector<16x256xf32>
    %11 = vector.shape_cast %10 : vector<16x256xf32> to vector<1x16x256xf32>
    %12 = vector.broadcast %11 : vector<1x16x256xf32> to vector<2x16x256xf32>
    %13 = arith.mulf %8, %12 : vector<2x16x256xf32>
    %14 = arith.addf %6, %13 : vector<2x16x256xf32>
    %c0_12 = arith.constant 0 : index
    %c2 = arith.constant 2 : index
    %c0_13 = arith.constant 0 : index
    %c0_14 = arith.constant 0 : index
    %15 = vector.load %arg1[%c0_12, %c2, %c0_13, %c0_14] : memref<2x8x16x256xf32, #tpu.memory_space<vmem>>, vector<2x1x16x256xf32>
    %16 = vector.shape_cast %15 : vector<2x1x16x256xf32> to vector<2x16x256xf32>
    %c2_15 = arith.constant 2 : index
    %c0_16 = arith.constant 0 : index
    %c0_17 = arith.constant 0 : index
    %17 = vector.load %arg2[%c2_15, %c0_16, %c0_17] : memref<8x16x256xf32, #tpu.memory_space<vmem>>, vector<1x16x256xf32>
    %18 = vector.shape_cast %17 : vector<1x16x256xf32> to vector<16x256xf32>
    %19 = vector.shape_cast %18 : vector<16x256xf32> to vector<1x16x256xf32>
    %20 = vector.broadcast %19 : vector<1x16x256xf32> to vector<2x16x256xf32>
    %21 = arith.mulf %16, %20 : vector<2x16x256xf32>
    %22 = arith.addf %14, %21 : vector<2x16x256xf32>
    %c0_18 = arith.constant 0 : index
    %c3 = arith.constant 3 : index
    %c0_19 = arith.constant 0 : index
    %c0_20 = arith.constant 0 : index
    %23 = vector.load %arg1[%c0_18, %c3, %c0_19, %c0_20] : memref<2x8x16x256xf32, #tpu.memory_space<vmem>>, vector<2x1x16x256xf32>
    %24 = vector.shape_cast %23 : vector<2x1x16x256xf32> to vector<2x16x256xf32>
    %c3_21 = arith.constant 3 : index
    %c0_22 = arith.constant 0 : index
    %c0_23 = arith.constant 0 : index
    %25 = vector.load %arg2[%c3_21, %c0_22, %c0_23] : memref<8x16x256xf32, #tpu.memory_space<vmem>>, vector<1x16x256xf32>
    %26 = vector.shape_cast %25 : vector<1x16x256xf32> to vector<16x256xf32>
    %27 = vector.shape_cast %26 : vector<16x256xf32> to vector<1x16x256xf32>
    %28 = vector.broadcast %27 : vector<1x16x256xf32> to vector<2x16x256xf32>
    %29 = arith.mulf %24, %28 : vector<2x16x256xf32>
    %30 = arith.addf %22, %29 : vector<2x16x256xf32>
    %c0_24 = arith.constant 0 : index
    %c4 = arith.constant 4 : index
    %c0_25 = arith.constant 0 : index
    %c0_26 = arith.constant 0 : index
    %31 = vector.load %arg1[%c0_24, %c4, %c0_25, %c0_26] : memref<2x8x16x256xf32, #tpu.memory_space<vmem>>, vector<2x1x16x256xf32>
    %32 = vector.shape_cast %31 : vector<2x1x16x256xf32> to vector<2x16x256xf32>
    %c4_27 = arith.constant 4 : index
    %c0_28 = arith.constant 0 : index
    %c0_29 = arith.constant 0 : index
    %33 = vector.load %arg2[%c4_27, %c0_28, %c0_29] : memref<8x16x256xf32, #tpu.memory_space<vmem>>, vector<1x16x256xf32>
    %34 = vector.shape_cast %33 : vector<1x16x256xf32> to vector<16x256xf32>
    %35 = vector.shape_cast %34 : vector<16x256xf32> to vector<1x16x256xf32>
    %36 = vector.broadcast %35 : vector<1x16x256xf32> to vector<2x16x256xf32>
    %37 = arith.mulf %32, %36 : vector<2x16x256xf32>
    %38 = arith.addf %30, %37 : vector<2x16x256xf32>
    %c0_30 = arith.constant 0 : index
    %c5 = arith.constant 5 : index
    %c0_31 = arith.constant 0 : index
    %c0_32 = arith.constant 0 : index
    %39 = vector.load %arg1[%c0_30, %c5, %c0_31, %c0_32] : memref<2x8x16x256xf32, #tpu.memory_space<vmem>>, vector<2x1x16x256xf32>
    %40 = vector.shape_cast %39 : vector<2x1x16x256xf32> to vector<2x16x256xf32>
    %c5_33 = arith.constant 5 : index
    %c0_34 = arith.constant 0 : index
    %c0_35 = arith.constant 0 : index
    %41 = vector.load %arg2[%c5_33, %c0_34, %c0_35] : memref<8x16x256xf32, #tpu.memory_space<vmem>>, vector<1x16x256xf32>
    %42 = vector.shape_cast %41 : vector<1x16x256xf32> to vector<16x256xf32>
    %43 = vector.shape_cast %42 : vector<16x256xf32> to vector<1x16x256xf32>
    %44 = vector.broadcast %43 : vector<1x16x256xf32> to vector<2x16x256xf32>
    %45 = arith.mulf %40, %44 : vector<2x16x256xf32>
    %46 = arith.addf %38, %45 : vector<2x16x256xf32>
    %c0_36 = arith.constant 0 : index
    %c6 = arith.constant 6 : index
    %c0_37 = arith.constant 0 : index
    %c0_38 = arith.constant 0 : index
    %47 = vector.load %arg1[%c0_36, %c6, %c0_37, %c0_38] : memref<2x8x16x256xf32, #tpu.memory_space<vmem>>, vector<2x1x16x256xf32>
    %48 = vector.shape_cast %47 : vector<2x1x16x256xf32> to vector<2x16x256xf32>
    %c6_39 = arith.constant 6 : index
    %c0_40 = arith.constant 0 : index
    %c0_41 = arith.constant 0 : index
    %49 = vector.load %arg2[%c6_39, %c0_40, %c0_41] : memref<8x16x256xf32, #tpu.memory_space<vmem>>, vector<1x16x256xf32>
    %50 = vector.shape_cast %49 : vector<1x16x256xf32> to vector<16x256xf32>
    %51 = vector.shape_cast %50 : vector<16x256xf32> to vector<1x16x256xf32>
    %52 = vector.broadcast %51 : vector<1x16x256xf32> to vector<2x16x256xf32>
    %53 = arith.mulf %48, %52 : vector<2x16x256xf32>
    %54 = arith.addf %46, %53 : vector<2x16x256xf32>
    %c0_42 = arith.constant 0 : index
    %c7 = arith.constant 7 : index
    %c0_43 = arith.constant 0 : index
    %c0_44 = arith.constant 0 : index
    %55 = vector.load %arg1[%c0_42, %c7, %c0_43, %c0_44] : memref<2x8x16x256xf32, #tpu.memory_space<vmem>>, vector<2x1x16x256xf32>
    %56 = vector.shape_cast %55 : vector<2x1x16x256xf32> to vector<2x16x256xf32>
    %c7_45 = arith.constant 7 : index
    %c0_46 = arith.constant 0 : index
    %c0_47 = arith.constant 0 : index
    %57 = vector.load %arg2[%c7_45, %c0_46, %c0_47] : memref<8x16x256xf32, #tpu.memory_space<vmem>>, vector<1x16x256xf32>
    %58 = vector.shape_cast %57 : vector<1x16x256xf32> to vector<16x256xf32>
    %59 = vector.shape_cast %58 : vector<16x256xf32> to vector<1x16x256xf32>
    %60 = vector.broadcast %59 : vector<1x16x256xf32> to vector<2x16x256xf32>
    %61 = arith.mulf %56, %60 : vector<2x16x256xf32>
    %62 = arith.addf %54, %61 : vector<2x16x256xf32>
    %cst = arith.constant dense<0xFF800000> : vector<2x256xf32>
    %63 = vector.multi_reduction <maximumf>, %62, %cst [1] : vector<2x16x256xf32> to vector<2x256xf32>
    %64 = vector.shape_cast %63 : vector<2x256xf32> to vector<1x2x256xf32>
    %c0_48 = arith.constant 0 : index
    %c0_49 = arith.constant 0 : index
    %c0_50 = arith.constant 0 : index
    %65 = vector.load %arg3[%c0_48, %c0_49, %c0_50] : memref<1x2x256xf32, #tpu.memory_space<vmem>>, vector<1x2x256xf32>
    tpu.vector_store %arg3[%c0_48, %c0_49, %c0_50], %64 {strides = array<i32>} : memref<1x2x256xf32, #tpu.memory_space<vmem>>, vector<1x2x256xf32>,
    %66 = vector.shape_cast %62 : vector<2x16x256xf32> to vector<2x16x16x16xf32>
    %cst_51 = arith.constant dense<0xFF800000> : vector<2x16x16xf32>
    %67 = vector.multi_reduction <maximumf>, %66, %cst_51 [2] : vector<2x16x16x16xf32> to vector<2x16x16xf32>
    %68 = vector.shape_cast %67 : vector<2x16x16xf32> to vector<2x256xf32>
    %c0_52 = arith.constant 0 : index
    %c0_53 = arith.constant 0 : index
    %69 = vector.load %arg4[%c0_52, %c0_53] : memref<2x256xf32, #tpu.memory_space<vmem>>, vector<2x256xf32>
    tpu.vector_store %arg4[%c0_52, %c0_53], %68 {strides = array<i32>} : memref<2x256xf32, #tpu.memory_space<vmem>>, vector<2x256xf32>,
    %cst_54 = arith.constant dense<0xFF800000> : vector<2x16x16xf32>
    %70 = vector.multi_reduction <maximumf>, %66, %cst_54 [3] : vector<2x16x16x16xf32> to vector<2x16x16xf32>
    %71 = vector.shape_cast %70 : vector<2x16x16xf32> to vector<2x256xf32>
    %c0_55 = arith.constant 0 : index
    %c0_56 = arith.constant 0 : index
    %72 = vector.load %arg5[%c0_55, %c0_56] : memref<2x256xf32, #tpu.memory_space<vmem>>, vector<2x256xf32>
    tpu.vector_store %arg5[%c0_55, %c0_56], %71 {strides = array<i32>} : memref<2x256xf32, #tpu.memory_space<vmem>>, vector<2x256xf32>,
    return
  }
  func.func @transform_0(%arg0: i32) -> (i32, i32, i32, i32) {
    %c0_i32 = arith.constant 0 : i32
    %c0_i32_0 = arith.constant 0 : i32
    %c0_i32_1 = arith.constant 0 : i32
    %c0_i32_2 = arith.constant 0 : i32
    return %c0_i32, %c0_i32_0, %arg0, %c0_i32_1 : i32, i32, i32, i32
  }
  func.func @transform_1(%arg0: i32) -> (i32, i32, i32) {
    %c0_i32 = arith.constant 0 : i32
    %c0_i32_0 = arith.constant 0 : i32
    %c0_i32_1 = arith.constant 0 : i32
    return %c0_i32, %arg0, %c0_i32_0 : i32, i32, i32
  }
  func.func @transform_2(%arg0: i32) -> (i32, i32, i32) {
    %c0_i32 = arith.constant 0 : i32
    %c0_i32_0 = arith.constant 0 : i32
    %c0_i32_1 = arith.constant 0 : i32
    return %arg0, %c0_i32, %c0_i32_0 : i32, i32, i32
  }
  func.func @transform_3(%arg0: i32) -> (i32, i32) {
    %c0_i32 = arith.constant 0 : i32
    %c0_i32_0 = arith.constant 0 : i32
    return %c0_i32, %arg0 : i32, i32
  }
  func.func @transform_4(%arg0: i32) -> (i32, i32) {
    %c0_i32 = arith.constant 0 : i32
    %c0_i32_0 = arith.constant 0 : i32
    return %c0_i32, %arg0 : i32, i32
  }
}

</mosaic_0001>

<llo_original>
// kernel: tpu_custom_call.1
$region0: #{tpu_custom_call.1}
  #allocation0 [shape = 'u32[]', space=smem, size = 0x4, offset = 0x4, fixed_abs, tag = 'smem constant byte address 0x4 - core index']
  #allocation1 [shape = 'u32[144,128]{1,0:T(1,128)}', space=vmem, size = 0x12000, scoped, tag = 'internal scratch']
  %s0 = inlined_call_operand.hbm [shape: f32[2,8,16,256], index: 0, kind: input, shape index: {}]
  %s1 = inlined_call_operand.hbm [shape: f32[8,16,256], index: 1, kind: input, shape index: {}]
  %s2 = inlined_call_operand.hbm [shape: f32[1,2,256], index: 2, kind: output, shape index: {0}]
  %s3 = inlined_call_operand.hbm [shape: f32[2,256], index: 3, kind: output, shape index: {1}]
  %s4 = inlined_call_operand.hbm [shape: f32[2,256], index: 4, kind: output, shape index: {2}]
  %5 = xla_tuple %s2, %s3, %s4
  %s6 = sld [smem:[#allocation0]]
  $region42: #{tpu_custom_call.1} parent=0
    _
  %s8 = ssub.s32 1, %s6
  %s9 = scalar_select 0, %s8, %s6
  $region1: #{tpu_custom_call.1} parent=0
    #allocation2 [shape = 'u8[262144]{0}', space=vmem, size = 0x40000, scoped, tag = 'input window, operand 0, single buffered']
    #allocation3 [shape = 's32[1]{0}', space=sflag, size = 0x4, scoped, tag = 'scoped memory for tpu_custom_call.1']
    #allocation4 [shape = 's32[1]{0}', space=sflag, size = 0x4, scoped, tag = 'scoped memory for tpu_custom_call.1']
    #allocation5 [shape = 'u8[131072]{0}', space=vmem, size = 0x20000, scoped, tag = 'input window, operand 1, single buffered']
    #allocation6 [shape = 's32[1]{0}', space=sflag, size = 0x4, scoped, tag = 'scoped memory for tpu_custom_call.1']
    #allocation7 [shape = 'u8[2048]{0}', space=vmem, size = 0x800, scoped, tag = 'output window, operand 0, single buffered']
    #allocation8 [shape = 'u8[2048]{0}', space=vmem, size = 0x800, scoped, tag = 'output window, operand 1, single buffered']
    #allocation9 [shape = 's32[1]{0}', space=sflag, size = 0x4, scoped, tag = 'scoped memory for tpu_custom_call.1']
    #allocation10 [shape = 'u8[2048]{0}', space=vmem, size = 0x800, scoped, tag = 'output window, operand 2, single buffered']
    %10 = vsyncpa [#allocation3], 0
    %11 = vsyncpa [#allocation6], 0
    %12 = vsyncpa [#allocation4], 0
    %13 = vsyncpa [#allocation9], 0
    // Predicated region
    $region2: #{tpu_custom_call.1} parent=1 // pred_check
      _
    $region3: #{tpu_custom_call.1} parent=1 // pred_check_branch
      %15 = sbr.rel (0) target = $region5
    $region4: #{tpu_custom_call.1} parent=1 // pred_region
      %s17 = ssub.s32 8192, 8192
      %18 = vsyncadd [#allocation3], %s17
      %s19 = sshll.u32 [#allocation2], 4
      %s20 = int_to_ptr.vmem [resolvable:$true] %s19
      %25 = dma.hbm_to_vmem [thread:$0]  %s0, 8192, %s20, [#allocation3], 256, 256, 16
    $region5: #{tpu_custom_call.1} parent=1 // pred_fallthru
      _
    // Predicated region
    $region6: #{tpu_custom_call.1} parent=1 // pred_check
      _
    $region7: #{tpu_custom_call.1} parent=1 // pred_check_branch
      %27 = sbr.rel (0) target = $region9
    $region8: #{tpu_custom_call.1} parent=1 // pred_region
      %s29 = ssub.s32 4096, 4096
      %30 = vsyncadd [#allocation6], %s29
      %s31 = sshll.u32 [#allocation5], 4
      %s32 = int_to_ptr.vmem [resolvable:$true] %s31
      %37 = dma.hbm_to_vmem [thread:$0]  %s1, 4096, %s32, [#allocation6], 256, 256, 16
    $region9: #{tpu_custom_call.1} parent=1 // pred_fallthru
      _
    // Predicated region
    $region10: #{tpu_custom_call.1} parent=1 // pred_check
      _
    $region11: #{tpu_custom_call.1} parent=1 // pred_check_branch
      %39 = sbr.rel (0) target = $region13
    $region12: #{tpu_custom_call.1} parent=1 // pred_region
      %40 = dma.done [#allocation3], 8192
    $region13: #{tpu_custom_call.1} parent=1 // pred_fallthru
      _
    // Predicated region
    $region14: #{tpu_custom_call.1} parent=1 // pred_check
      _
    $region15: #{tpu_custom_call.1} parent=1 // pred_check_branch
      %42 = sbr.rel (0) target = $region17
    $region16: #{tpu_custom_call.1} parent=1 // pred_region
      %43 = dma.done [#allocation6], 4096
    $region17: #{tpu_custom_call.1} parent=1 // pred_fallthru
      _
    %v44 = vld [vmem:[#allocation2] sm:$0xff]
    %v45 = vld [vmem:[#allocation2 + $0x8] sm:$0xff]
    %v46 = vld [vmem:[#allocation2 + $0x10] sm:$0xff]
    %v47 = vld [vmem:[#allocation2 + $0x18] sm:$0xff]
    %v48 = vld [vmem:[#allocation2 + $0x100] sm:$0xff]
    %v49 = vld [vmem:[#allocation2 + $0x108] sm:$0xff]
    %v50 = vld [vmem:[#allocation2 + $0x110] sm:$0xff]
    %v51 = vld [vmem:[#allocation2 + $0x118] sm:$0xff]
    %v52 = vld [vmem:[#allocation5] sm:$0xff]
    %v53 = vld [vmem:[#allocation5 + $0x8] sm:$0xff]
    %v54 = vld [vmem:[#allocation5 + $0x10] sm:$0xff]
    %v55 = vld [vmem:[#allocation5 + $0x18] sm:$0xff]
    %v56 = vmul.f32 %v44, %v52
    %v57 = vmul.f32 %v45, %v53
    %v58 = vmul.f32 %v46, %v54
    %v59 = vmul.f32 %v47, %v55
    %v60 = vmul.f32 %v48, %v52
    %v61 = vmul.f32 %v49, %v53
    %v62 = vmul.f32 %v50, %v54
    %v63 = vmul.f32 %v51, %v55
    %s64 = scalar_lea.vmem [#allocation2], 32
    %v65 = vld [vmem:[%s64] sm:$0xff]
    %v66 = vld [vmem:[%s64 + $0x8] sm:$0xff]
    %v67 = vld [vmem:[%s64 + $0x10] sm:$0xff]
    %v68 = vld [vmem:[%s64 + $0x18] sm:$0xff]
    %v69 = vld [vmem:[%s64 + $0x100] sm:$0xff]
    %v70 = vld [vmem:[%s64 + $0x108] sm:$0xff]
    %v71 = vld [vmem:[%s64 + $0x110] sm:$0xff]
    %v72 = vld [vmem:[%s64 + $0x118] sm:$0xff]
    %s73 = scalar_lea.vmem [#allocation5], 32
    %v74 = vld [vmem:[%s73] sm:$0xff]
    %v75 = vld [vmem:[%s73 + $0x8] sm:$0xff]
    %v76 = vld [vmem:[%s73 + $0x10] sm:$0xff]
    %v77 = vld [vmem:[%s73 + $0x18] sm:$0xff]
    %v78 = vmul.f32 %v65, %v74
    %v79 = vmul.f32 %v66, %v75
    %v80 = vmul.f32 %v67, %v76
    %v81 = vmul.f32 %v68, %v77
    %v82 = vmul.f32 %v69, %v74
    %v83 = vmul.f32 %v70, %v75
    %v84 = vmul.f32 %v71, %v76
    %v85 = vmul.f32 %v72, %v77
    %v86 = vadd.f32 %v56, %v78
    %v87 = vadd.f32 %v57, %v79
    %v88 = vadd.f32 %v58, %v80
    %v89 = vadd.f32 %v59, %v81
    %v90 = vadd.f32 %v60, %v82
    %v91 = vadd.f32 %v61, %v83
    %v92 = vadd.f32 %v62, %v84
    %v93 = vadd.f32 %v63, %v85
    %s94 = scalar_lea.vmem [#allocation2], 64
    %v95 = vld [vmem:[%s94] sm:$0xff]
    %v96 = vld [vmem:[%s94 + $0x8] sm:$0xff]
    %v97 = vld [vmem:[%s94 + $0x10] sm:$0xff]
    %v98 = vld [vmem:[%s94 + $0x18] sm:$0xff]
    %v99 = vld [vmem:[%s94 + $0x100] sm:$0xff]
    %v100 = vld [vmem:[%s94 + $0x108] sm:$0xff]
    %v101 = vld [vmem:[%s94 + $0x110] sm:$0xff]
    %v102 = vld [vmem:[%s94 + $0x118] sm:$0xff]
    %s103 = scalar_lea.vmem [#allocation5], 64
    %v104 = vld [vmem:[%s103] sm:$0xff]
    %v105 = vld [vmem:[%s103 + $0x8] sm:$0xff]
    %v106 = vld [vmem:[%s103 + $0x10] sm:$0xff]
    %v107 = vld [vmem:[%s103 + $0x18] sm:$0xff]
    %v108 = vmul.f32 %v95, %v104
    %v109 = vmul.f32 %v96, %v105
    %v110 = vmul.f32 %v97, %v106
    %v111 = vmul.f32 %v98, %v107
    %v112 = vmul.f32 %v99, %v104
    %v113 = vmul.f32 %v100, %v105
    %v114 = vmul.f32 %v101, %v106
    %v115 = vmul.f32 %v102, %v107
    %v116 = vadd.f32 %v86, %v108
    %v117 = vadd.f32 %v87, %v109
    %v118 = vadd.f32 %v88, %v110
    %v119 = vadd.f32 %v89, %v111
    %v120 = vadd.f32 %v90, %v112
    %v121 = vadd.f32 %v91, %v113
    %v122 = vadd.f32 %v92, %v114
    %v123 = vadd.f32 %v93, %v115
    %s124 = scalar_lea.vmem [#allocation2], 96
    %v125 = vld [vmem:[%s124] sm:$0xff]
    %v126 = vld [vmem:[%s124 + $0x8] sm:$0xff]
    %v127 = vld [vmem:[%s124 + $0x10] sm:$0xff]
    %v128 = vld [vmem:[%s124 + $0x18] sm:$0xff]
    %v129 = vld [vmem:[%s124 + $0x100] sm:$0xff]
    %v130 = vld [vmem:[%s124 + $0x108] sm:$0xff]
    %v131 = vld [vmem:[%s124 + $0x110] sm:$0xff]
    %v132 = vld [vmem:[%s124 + $0x118] sm:$0xff]
    %s133 = scalar_lea.vmem [#allocation5], 96
    %v134 = vld [vmem:[%s133] sm:$0xff]
    %v135 = vld [vmem:[%s133 + $0x8] sm:$0xff]
    %v136 = vld [vmem:[%s133 + $0x10] sm:$0xff]
    %v137 = vld [vmem:[%s133 + $0x18] sm:$0xff]
    %v138 = vmul.f32 %v125, %v134
    %v139 = vmul.f32 %v126, %v135
    %v140 = vmul.f32 %v127, %v136
    %v141 = vmul.f32 %v128, %v137
    %v142 = vmul.f32 %v129, %v134
    %v143 = vmul.f32 %v130, %v135
    %v144 = vmul.f32 %v131, %v136
    %v145 = vmul.f32 %v132, %v137
    %v146 = vadd.f32 %v116, %v138
    %v147 = vadd.f32 %v117, %v139
    %v148 = vadd.f32 %v118, %v140
    %v149 = vadd.f32 %v119, %v141
    %v150 = vadd.f32 %v120, %v142
    %v151 = vadd.f32 %v121, %v143
    %v152 = vadd.f32 %v122, %v144
    %v153 = vadd.f32 %v123, %v145
    %s154 = scalar_lea.vmem [#allocation2], 128
    %v155 = vld [vmem:[%s154] sm:$0xff]
    %v156 = vld [vmem:[%s154 + $0x8] sm:$0xff]
    %v157 = vld [vmem:[%s154 + $0x10] sm:$0xff]
    %v158 = vld [vmem:[%s154 + $0x18] sm:$0xff]
    %v159 = vld [vmem:[%s154 + $0x100] sm:$0xff]
    %v160 = vld [vmem:[%s154 + $0x108] sm:$0xff]
    %v161 = vld [vmem:[%s154 + $0x110] sm:$0xff]
    %v162 = vld [vmem:[%s154 + $0x118] sm:$0xff]
    %s163 = scalar_lea.vmem [#allocation5], 128
    %v164 = vld [vmem:[%s163] sm:$0xff]
    %v165 = vld [vmem:[%s163 + $0x8] sm:$0xff]
    %v166 = vld [vmem:[%s163 + $0x10] sm:$0xff]
    %v167 = vld [vmem:[%s163 + $0x18] sm:$0xff]
    %v168 = vmul.f32 %v155, %v164
    %v169 = vmul.f32 %v156, %v165
    %v170 = vmul.f32 %v157, %v166
    %v171 = vmul.f32 %v158, %v167
    %v172 = vmul.f32 %v159, %v164
    %v173 = vmul.f32 %v160, %v165
    %v174 = vmul.f32 %v161, %v166
    %v175 = vmul.f32 %v162, %v167
    %v176 = vadd.f32 %v146, %v168
    %v177 = vadd.f32 %v147, %v169
    %v178 = vadd.f32 %v148, %v170
    %v179 = vadd.f32 %v149, %v171
    %v180 = vadd.f32 %v150, %v172
    %v181 = vadd.f32 %v151, %v173
    %v182 = vadd.f32 %v152, %v174
    %v183 = vadd.f32 %v153, %v175
    %s184 = scalar_lea.vmem [#allocation2], 160
    %v185 = vld [vmem:[%s184] sm:$0xff]
    %v186 = vld [vmem:[%s184 + $0x8] sm:$0xff]
    %v187 = vld [vmem:[%s184 + $0x10] sm:$0xff]
    %v188 = vld [vmem:[%s184 + $0x18] sm:$0xff]
    %v189 = vld [vmem:[%s184 + $0x100] sm:$0xff]
    %v190 = vld [vmem:[%s184 + $0x108] sm:$0xff]
    %v191 = vld [vmem:[%s184 + $0x110] sm:$0xff]
    %v192 = vld [vmem:[%s184 + $0x118] sm:$0xff]
    %s193 = scalar_lea.vmem [#allocation5], 160
    %v194 = vld [vmem:[%s193] sm:$0xff]
    %v195 = vld [vmem:[%s193 + $0x8] sm:$0xff]
    %v196 = vld [vmem:[%s193 + $0x10] sm:$0xff]
    %v197 = vld [vmem:[%s193 + $0x18] sm:$0xff]
    %v198 = vmul.f32 %v185, %v194
    %v199 = vmul.f32 %v186, %v195
    %v200 = vmul.f32 %v187, %v196
    %v201 = vmul.f32 %v188, %v197
    %v202 = vmul.f32 %v189, %v194
    %v203 = vmul.f32 %v190, %v195
    %v204 = vmul.f32 %v191, %v196
    %v205 = vmul.f32 %v192, %v197
    %v206 = vadd.f32 %v176, %v198
    %v207 = vadd.f32 %v177, %v199
    %v208 = vadd.f32 %v178, %v200
    %v209 = vadd.f32 %v179, %v201
    %v210 = vadd.f32 %v180, %v202
    %v211 = vadd.f32 %v181, %v203
    %v212 = vadd.f32 %v182, %v204
    %v213 = vadd.f32 %v183, %v205
    %s214 = scalar_lea.vmem [#allocation2], 192
    %v215 = vld [vmem:[%s214] sm:$0xff]
    %v216 = vld [vmem:[%s214 + $0x8] sm:$0xff]
    %v217 = vld [vmem:[%s214 + $0x10] sm:$0xff]
    %v218 = vld [vmem:[%s214 + $0x18] sm:$0xff]
    %v219 = vld [vmem:[%s214 + $0x100] sm:$0xff]
    %v220 = vld [vmem:[%s214 + $0x108] sm:$0xff]
    %v221 = vld [vmem:[%s214 + $0x110] sm:$0xff]
    %v222 = vld [vmem:[%s214 + $0x118] sm:$0xff]
    %s223 = scalar_lea.vmem [#allocation5], 192
    %v224 = vld [vmem:[%s223] sm:$0xff]
    %v225 = vld [vmem:[%s223 + $0x8] sm:$0xff]
    %v226 = vld [vmem:[%s223 + $0x10] sm:$0xff]
    %v227 = vld [vmem:[%s223 + $0x18] sm:$0xff]
    %v228 = vmul.f32 %v215, %v224
    %v229 = vmul.f32 %v216, %v225
    %v230 = vmul.f32 %v217, %v226
    %v231 = vmul.f32 %v218, %v227
    %v232 = vmul.f32 %v219, %v224
    %v233 = vmul.f32 %v220, %v225
    %v234 = vmul.f32 %v221, %v226
    %v235 = vmul.f32 %v222, %v227
    %v236 = vadd.f32 %v206, %v228
    %v237 = vadd.f32 %v207, %v229
    %v238 = vadd.f32 %v208, %v230
    %v239 = vadd.f32 %v209, %v231
    %v240 = vadd.f32 %v210, %v232
    %v241 = vadd.f32 %v211, %v233
    %v242 = vadd.f32 %v212, %v234
    %v243 = vadd.f32 %v213, %v235
    %s244 = scalar_lea.vmem [#allocation2], 224
    %v245 = vld [vmem:[%s244] sm:$0xff]
    %v246 = vld [vmem:[%s244 + $0x8] sm:$0xff]
    %v247 = vld [vmem:[%s244 + $0x10] sm:$0xff]
    %v248 = vld [vmem:[%s244 + $0x18] sm:$0xff]
    %v249 = vld [vmem:[%s244 + $0x100] sm:$0xff]
    %v250 = vld [vmem:[%s244 + $0x108] sm:$0xff]
    %v251 = vld [vmem:[%s244 + $0x110] sm:$0xff]
    %v252 = vld [vmem:[%s244 + $0x118] sm:$0xff]
    %s253 = scalar_lea.vmem [#allocation5], 224
    %v254 = vld [vmem:[%s253] sm:$0xff]
    %v255 = vld [vmem:[%s253 + $0x8] sm:$0xff]
    %v256 = vld [vmem:[%s253 + $0x10] sm:$0xff]
    %v257 = vld [vmem:[%s253 + $0x18] sm:$0xff]
    %v258 = vmul.f32 %v245, %v254
    %v259 = vmul.f32 %v246, %v255
    %v260 = vmul.f32 %v247, %v256
    %v261 = vmul.f32 %v248, %v257
    %v262 = vmul.f32 %v249, %v254
    %v263 = vmul.f32 %v250, %v255
    %v264 = vmul.f32 %v251, %v256
    %v265 = vmul.f32 %v252, %v257
    %v266 = vadd.f32 %v236, %v258
    %v267 = vadd.f32 %v237, %v259
    %v268 = vadd.f32 %v238, %v260
    %v269 = vadd.f32 %v239, %v261
    %v270 = vadd.f32 %v240, %v262
    %v271 = vadd.f32 %v241, %v263
    %v272 = vadd.f32 %v242, %v264
    %v273 = vadd.f32 %v243, %v265
    %v274 = vmax.f32 %v266, %v268
    %v275 = vrot.slane %v274, 4
    %v276 = vmax.f32 %v274, %v275
    %v277 = vrot.slane %v276, 2
    %v278 = vmax.f32 %v276, %v277
    %v279 = vrot.slane %v278, 1
    %v280 = vmax.f32 %v278, %v279
    %v281 = vmax.f32 %v267, %v269
    %v282 = vrot.slane %v281, 4
    %v283 = vmax.f32 %v281, %v282
    %v284 = vrot.slane %v283, 2
    %v285 = vmax.f32 %v283, %v284
    %v286 = vrot.slane %v285, 1
    %v287 = vmax.f32 %v285, %v286
    %v288 = vmax.f32 %v270, %v272
    %v289 = vrot.slane %v288, 4
    %v290 = vmax.f32 %v288, %v289
    %v291 = vrot.slane %v290, 2
    %v292 = vmax.f32 %v290, %v291
    %v293 = vrot.slane %v292, 1
    %v294 = vmax.f32 %v292, %v293
    %v295 = vmax.f32 %v271, %v273
    %v296 = vrot.slane %v295, 4
    %v297 = vmax.f32 %v295, %v296
    %v298 = vrot.slane %v297, 2
    %v299 = vmax.f32 %v297, %v298
    %v300 = vrot.slane %v299, 1
    %v301 = vmax.f32 %v299, %v300
    %v306 = vcombine.low %v280, %v287
    %v308 = vunpack.c.l.s4 1983009808
    %v309 = vunpack.c.0.s8 %v308
    %v310 = vlaneseq
    %v311 = vshrl.u32 %v310, 7
    %v312 = vsub.s32 %v309, %v311
    %v313 = vrot.slane %v306, %v312
    %v314 = vcombine.low %v294, %v301
    %v316 = vunpack.c.l.s4 1983009808
    %v317 = vunpack.c.0.s8 %v316
    %v318 = vlaneseq
    %v319 = vshrl.u32 %v318, 7
    %v320 = vsub.s32 %v317, %v319
    %v321 = vrot.slane %v314, %v320
    %vm322 = vcmask 1042434
    %vm323 = vcmask 1044484
    %v324 = vsel %vm323, %v313, %v313
    %vm325 = vcmask 1046534
    %v326 = vsel %vm325, %v313, %v324
    %v327 = vrot.slane %v321, 7
    %vm328 = vcmask 1041409
    %v329 = vsel %vm328, %v327, %v326
    %vm330 = vcmask 1043459
    %v331 = vsel %vm330, %v327, %v329
    %vm332 = vcmask 1045509
    %v333 = vsel %vm332, %v327, %v331
    %vm334 = vcmask 1047559
    %v335 = vsel %vm334, %v327, %v333
    %337 = vst [vmem:[#allocation7] sm:$0xf] %v335
    %342 = vrot.lane.b32.xlu0 %v266, 112
    %v343 = vpop.permute.xlu0 %342
    %344 = vrot.lane.b32.xlu0 %v268, 112
    %v345 = vpop.permute.xlu0 %344
    %346 = vrot.lane.b32.xlu0 %v270, 112
    %v347 = vpop.permute.xlu0 %346
    %348 = vrot.lane.b32.xlu0 %v272, 112
    %v349 = vpop.permute.xlu0 %348
    %354 = vrot.lane.b32.xlu0 %v266, 96
    %v355 = vpop.permute.xlu0 %354
    %356 = vrot.lane.b32.xlu0 %v268, 96
    %v357 = vpop.permute.xlu0 %356
    %358 = vrot.lane.b32.xlu0 %v270, 96
    %v359 = vpop.permute.xlu0 %358
    %360 = vrot.lane.b32.xlu0 %v272, 96
    %v361 = vpop.permute.xlu0 %360
    %366 = vrot.lane.b32.xlu0 %v266, 80
    %v367 = vpop.permute.xlu0 %366
    %368 = vrot.lane.b32.xlu0 %v268, 80
    %v369 = vpop.permute.xlu0 %368
    %370 = vrot.lane.b32.xlu0 %v270, 80
    %v371 = vpop.permute.xlu0 %370
    %372 = vrot.lane.b32.xlu0 %v272, 80
    %v373 = vpop.permute.xlu0 %372
    %378 = vrot.lane.b32.xlu0 %v266, 64
    %v379 = vpop.permute.xlu0 %378
    %380 = vrot.lane.b32.xlu0 %v268, 64
    %v381 = vpop.permute.xlu0 %380
    %382 = vrot.lane.b32.xlu0 %v270, 64
    %v383 = vpop.permute.xlu0 %382
    %384 = vrot.lane.b32.xlu0 %v272, 64
    %v385 = vpop.permute.xlu0 %384
    %390 = vrot.lane.b32.xlu0 %v266, 48
    %v391 = vpop.permute.xlu0 %390
    %392 = vrot.lane.b32.xlu0 %v268, 48
    %v393 = vpop.permute.xlu0 %392
    %394 = vrot.lane.b32.xlu0 %v270, 48
    %v395 = vpop.permute.xlu0 %394
    %396 = vrot.lane.b32.xlu0 %v272, 48
    %v397 = vpop.permute.xlu0 %396
    %402 = vrot.lane.b32.xlu0 %v266, 32
    %v403 = vpop.permute.xlu0 %402
    %404 = vrot.lane.b32.xlu0 %v268, 32
    %v405 = vpop.permute.xlu0 %404
    %406 = vrot.lane.b32.xlu0 %v270, 32
    %v407 = vpop.permute.xlu0 %406
    %408 = vrot.lane.b32.xlu0 %v272, 32
    %v409 = vpop.permute.xlu0 %408
    %414 = vrot.lane.b32.xlu0 %v266, 16
    %v415 = vpop.permute.xlu0 %414
    %416 = vrot.lane.b32.xlu0 %v268, 16
    %v417 = vpop.permute.xlu0 %416
    %418 = vrot.lane.b32.xlu0 %v270, 16
    %v419 = vpop.permute.xlu0 %418
    %420 = vrot.lane.b32.xlu0 %v272, 16
    %v421 = vpop.permute.xlu0 %420
    %430 = vrot.lane.b32.xlu0 %v267, 112
    %v431 = vpop.permute.xlu0 %430
    %432 = vrot.lane.b32.xlu0 %v269, 112
    %v433 = vpop.permute.xlu0 %432
    %434 = vrot.lane.b32.xlu0 %v271, 112
    %v435 = vpop.permute.xlu0 %434
    %436 = vrot.lane.b32.xlu0 %v273, 112
    %v437 = vpop.permute.xlu0 %436
    %442 = vrot.lane.b32.xlu0 %v267, 96
    %v443 = vpop.permute.xlu0 %442
    %444 = vrot.lane.b32.xlu0 %v269, 96
    %v445 = vpop.permute.xlu0 %444
    %446 = vrot.lane.b32.xlu0 %v271, 96
    %v447 = vpop.permute.xlu0 %446
    %448 = vrot.lane.b32.xlu0 %v273, 96
    %v449 = vpop.permute.xlu0 %448
    %454 = vrot.lane.b32.xlu0 %v267, 80
    %v455 = vpop.permute.xlu0 %454
    %456 = vrot.lane.b32.xlu0 %v269, 80
    %v457 = vpop.permute.xlu0 %456
    %458 = vrot.lane.b32.xlu0 %v271, 80
    %v459 = vpop.permute.xlu0 %458
    %460 = vrot.lane.b32.xlu0 %v273, 80
    %v461 = vpop.permute.xlu0 %460
    %466 = vrot.lane.b32.xlu0 %v267, 64
    %v467 = vpop.permute.xlu0 %466
    %468 = vrot.lane.b32.xlu0 %v269, 64
    %v469 = vpop.permute.xlu0 %468
    %470 = vrot.lane.b32.xlu0 %v271, 64
    %v471 = vpop.permute.xlu0 %470
    %472 = vrot.lane.b32.xlu0 %v273, 64
    %v473 = vpop.permute.xlu0 %472
    %478 = vrot.lane.b32.xlu0 %v267, 48
    %v479 = vpop.permute.xlu0 %478
    %480 = vrot.lane.b32.xlu0 %v269, 48
    %v481 = vpop.permute.xlu0 %480
    %482 = vrot.lane.b32.xlu0 %v271, 48
    %v483 = vpop.permute.xlu0 %482
    %484 = vrot.lane.b32.xlu0 %v273, 48
    %v485 = vpop.permute.xlu0 %484
    %490 = vrot.lane.b32.xlu0 %v267, 32
    %v491 = vpop.permute.xlu0 %490
    %492 = vrot.lane.b32.xlu0 %v269, 32
    %v493 = vpop.permute.xlu0 %492
    %494 = vrot.lane.b32.xlu0 %v271, 32
    %v495 = vpop.permute.xlu0 %494
    %496 = vrot.lane.b32.xlu0 %v273, 32
    %v497 = vpop.permute.xlu0 %496
    %502 = vrot.lane.b32.xlu0 %v267, 16
    %v503 = vpop.permute.xlu0 %502
    %504 = vrot.lane.b32.xlu0 %v269, 16
    %v505 = vpop.permute.xlu0 %504
    %506 = vrot.lane.b32.xlu0 %v271, 16
    %v507 = vpop.permute.xlu0 %506
    %508 = vrot.lane.b32.xlu0 %v273, 16
    %v509 = vpop.permute.xlu0 %508
    %v514 = vcombine.low %v266, %v355
    %v515 = vcombine.high %v266, %v355
    %v517 = vunpack.c.l.s4 1983009808
    %v518 = vunpack.c.0.s8 %v517
    %v519 = vlaneseq
    %v520 = vshrl.u32 %v519, 7
    %v521 = vsub.s32 %v518, %v520
    %v522 = vrot.slane %v514, %v521
    %v524 = vunpack.c.l.s4 1983009808
    %v525 = vunpack.c.0.s8 %v524
    %v526 = vlaneseq
    %v527 = vshrl.u32 %v526, 7
    %v528 = vsub.s32 %v525, %v527
    %v529 = vrot.slane %v515, %v528
    %v530 = vcombine.low %v343, %v367
    %v531 = vcombine.high %v343, %v367
    %v533 = vunpack.c.l.s4 1983009808
    %v534 = vunpack.c.0.s8 %v533
    %v535 = vlaneseq
    %v536 = vshrl.u32 %v535, 7
    %v537 = vsub.s32 %v534, %v536
    %v538 = vrot.slane %v530, %v537
    %v540 = vunpack.c.l.s4 1983009808
    %v541 = vunpack.c.0.s8 %v540
    %v542 = vlaneseq
    %v543 = vshrl.u32 %v542, 7
    %v544 = vsub.s32 %v541, %v543
    %v545 = vrot.slane %v531, %v544
    %v546 = vcombine.low %v379, %v403
    %v547 = vcombine.high %v379, %v403
    %v549 = vunpack.c.l.s4 1983009808
    %v550 = vunpack.c.0.s8 %v549
    %v551 = vlaneseq
    %v552 = vshrl.u32 %v551, 7
    %v553 = vsub.s32 %v550, %v552
    %v554 = vrot.slane %v546, %v553
    %v556 = vunpack.c.l.s4 1983009808
    %v557 = vunpack.c.0.s8 %v556
    %v558 = vlaneseq
    %v559 = vshrl.u32 %v558, 7
    %v560 = vsub.s32 %v557, %v559
    %v561 = vrot.slane %v547, %v560
    %v562 = vcombine.low %v391, %v415
    %v563 = vcombine.high %v391, %v415
    %v565 = vunpack.c.l.s4 1983009808
    %v566 = vunpack.c.0.s8 %v565
    %v567 = vlaneseq
    %v568 = vshrl.u32 %v567, 7
    %v569 = vsub.s32 %v566, %v568
    %v570 = vrot.slane %v562, %v569
    %v572 = vunpack.c.l.s4 1983009808
    %v573 = vunpack.c.0.s8 %v572
    %v574 = vlaneseq
    %v575 = vshrl.u32 %v574, 7
    %v576 = vsub.s32 %v573, %v575
    %v577 = vrot.slane %v563, %v576
    %v578 = vcombine.low %v522, %v538
    %v579 = vcombine.high %v522, %v538
    %v581 = vunpack.c.l.s4 1934713408
    %v582 = vunpack.c.0.s8 %v581
    %v583 = vlaneseq
    %v584 = vshrl.u32 %v583, 7
    %v585 = vsub.s32 %v582, %v584
    %v586 = vrot.slane %v578, %v585
    %v588 = vunpack.c.l.s4 1934713408
    %v589 = vunpack.c.0.s8 %v588
    %v590 = vlaneseq
    %v591 = vshrl.u32 %v590, 7
    %v592 = vsub.s32 %v589, %v591
    %v593 = vrot.slane %v579, %v592
    %v594 = vcombine.low %v529, %v545
    %v595 = vcombine.high %v529, %v545
    %v597 = vunpack.c.l.s4 1934713408
    %v598 = vunpack.c.0.s8 %v597
    %v599 = vlaneseq
    %v600 = vshrl.u32 %v599, 7
    %v601 = vsub.s32 %v598, %v600
    %v602 = vrot.slane %v594, %v601
    %v604 = vunpack.c.l.s4 1934713408
    %v605 = vunpack.c.0.s8 %v604
    %v606 = vlaneseq
    %v607 = vshrl.u32 %v606, 7
    %v608 = vsub.s32 %v605, %v607
    %v609 = vrot.slane %v595, %v608
    %v610 = vcombine.low %v554, %v570
    %v611 = vcombine.high %v554, %v570
    %v613 = vunpack.c.l.s4 1934713408
    %v614 = vunpack.c.0.s8 %v613
    %v615 = vlaneseq
    %v616 = vshrl.u32 %v615, 7
    %v617 = vsub.s32 %v614, %v616
    %v618 = vrot.slane %v610, %v617
    %v620 = vunpack.c.l.s4 1934713408
    %v621 = vunpack.c.0.s8 %v620
    %v622 = vlaneseq
    %v623 = vshrl.u32 %v622, 7
    %v624 = vsub.s32 %v621, %v623
    %v625 = vrot.slane %v611, %v624
    %v626 = vcombine.low %v561, %v577
    %v627 = vcombine.high %v561, %v577
    %v629 = vunpack.c.l.s4 1934713408
    %v630 = vunpack.c.0.s8 %v629
    %v631 = vlaneseq
    %v632 = vshrl.u32 %v631, 7
    %v633 = vsub.s32 %v630, %v632
    %v634 = vrot.slane %v626, %v633
    %v636 = vunpack.c.l.s4 1934713408
    %v637 = vunpack.c.0.s8 %v636
    %v638 = vlaneseq
    %v639 = vshrl.u32 %v638, 7
    %v640 = vsub.s32 %v637, %v639
    %v641 = vrot.slane %v627, %v640
    %v642 = vcombine.low %v586, %v618
    %v643 = vcombine.high %v586, %v618
    %v644 = vcombine.low %v593, %v625
    %v645 = vcombine.high %v593, %v625
    %v646 = vcombine.low %v602, %v634
    %v647 = vcombine.high %v602, %v634
    %v648 = vcombine.low %v609, %v641
    %v649 = vcombine.high %v609, %v641
    %v650 = vcombine.low %v267, %v443
    %v651 = vcombine.high %v267, %v443
    %v653 = vunpack.c.l.s4 1983009808
    %v654 = vunpack.c.0.s8 %v653
    %v655 = vlaneseq
    %v656 = vshrl.u32 %v655, 7
    %v657 = vsub.s32 %v654, %v656
    %v658 = vrot.slane %v650, %v657
    %v660 = vunpack.c.l.s4 1983009808
    %v661 = vunpack.c.0.s8 %v660
    %v662 = vlaneseq
    %v663 = vshrl.u32 %v662, 7
    %v664 = vsub.s32 %v661, %v663
    %v665 = vrot.slane %v651, %v664
    %v666 = vcombine.low %v431, %v455
    %v667 = vcombine.high %v431, %v455
    %v669 = vunpack.c.l.s4 1983009808
    %v670 = vunpack.c.0.s8 %v669
    %v671 = vlaneseq
    %v672 = vshrl.u32 %v671, 7
    %v673 = vsub.s32 %v670, %v672
    %v674 = vrot.slane %v666, %v673
    %v676 = vunpack.c.l.s4 1983009808
    %v677 = vunpack.c.0.s8 %v676
    %v678 = vlaneseq
    %v679 = vshrl.u32 %v678, 7
    %v680 = vsub.s32 %v677, %v679
    %v681 = vrot.slane %v667, %v680
    %v682 = vcombine.low %v467, %v491
    %v683 = vcombine.high %v467, %v491
    %v685 = vunpack.c.l.s4 1983009808
    %v686 = vunpack.c.0.s8 %v685
    %v687 = vlaneseq
    %v688 = vshrl.u32 %v687, 7
    %v689 = vsub.s32 %v686, %v688
    %v690 = vrot.slane %v682, %v689
    %v692 = vunpack.c.l.s4 1983009808
    %v693 = vunpack.c.0.s8 %v692
    %v694 = vlaneseq
    %v695 = vshrl.u32 %v694, 7
    %v696 = vsub.s32 %v693, %v695
    %v697 = vrot.slane %v683, %v696
    %v698 = vcombine.low %v479, %v503
    %v699 = vcombine.high %v479, %v503
    %v701 = vunpack.c.l.s4 1983009808
    %v702 = vunpack.c.0.s8 %v701
    %v703 = vlaneseq
    %v704 = vshrl.u32 %v703, 7
    %v705 = vsub.s32 %v702, %v704
    %v706 = vrot.slane %v698, %v705
    %v708 = vunpack.c.l.s4 1983009808
    %v709 = vunpack.c.0.s8 %v708
    %v710 = vlaneseq
    %v711 = vshrl.u32 %v710, 7
    %v712 = vsub.s32 %v709, %v711
    %v713 = vrot.slane %v699, %v712
    %v714 = vcombine.low %v658, %v674
    %v715 = vcombine.high %v658, %v674
    %v717 = vunpack.c.l.s4 1934713408
    %v718 = vunpack.c.0.s8 %v717
    %v719 = vlaneseq
    %v720 = vshrl.u32 %v719, 7
    %v721 = vsub.s32 %v718, %v720
    %v722 = vrot.slane %v714, %v721
    %v724 = vunpack.c.l.s4 1934713408
    %v725 = vunpack.c.0.s8 %v724
    %v726 = vlaneseq
    %v727 = vshrl.u32 %v726, 7
    %v728 = vsub.s32 %v725, %v727
    %v729 = vrot.slane %v715, %v728
    %v730 = vcombine.low %v665, %v681
    %v731 = vcombine.high %v665, %v681
    %v733 = vunpack.c.l.s4 1934713408
    %v734 = vunpack.c.0.s8 %v733
    %v735 = vlaneseq
    %v736 = vshrl.u32 %v735, 7
    %v737 = vsub.s32 %v734, %v736
    %v738 = vrot.slane %v730, %v737
    %v740 = vunpack.c.l.s4 1934713408
    %v741 = vunpack.c.0.s8 %v740
    %v742 = vlaneseq
    %v743 = vshrl.u32 %v742, 7
    %v744 = vsub.s32 %v741, %v743
    %v745 = vrot.slane %v731, %v744
    %v746 = vcombine.low %v690, %v706
    %v747 = vcombine.high %v690, %v706
    %v749 = vunpack.c.l.s4 1934713408
    %v750 = vunpack.c.0.s8 %v749
    %v751 = vlaneseq
    %v752 = vshrl.u32 %v751, 7
    %v753 = vsub.s32 %v750, %v752
    %v754 = vrot.slane %v746, %v753
    %v756 = vunpack.c.l.s4 1934713408
    %v757 = vunpack.c.0.s8 %v756
    %v758 = vlaneseq
    %v759 = vshrl.u32 %v758, 7
    %v760 = vsub.s32 %v757, %v759
    %v761 = vrot.slane %v747, %v760
    %v762 = vcombine.low %v697, %v713
    %v763 = vcombine.high %v697, %v713
    %v765 = vunpack.c.l.s4 1934713408
    %v766 = vunpack.c.0.s8 %v765
    %v767 = vlaneseq
    %v768 = vshrl.u32 %v767, 7
    %v769 = vsub.s32 %v766, %v768
    %v770 = vrot.slane %v762, %v769
    %v772 = vunpack.c.l.s4 1934713408
    %v773 = vunpack.c.0.s8 %v772
    %v774 = vlaneseq
    %v775 = vshrl.u32 %v774, 7
    %v776 = vsub.s32 %v773, %v775
    %v777 = vrot.slane %v763, %v776
    %v778 = vcombine.low %v722, %v754
    %v779 = vcombine.high %v722, %v754
    %v780 = vcombine.low %v729, %v761
    %v781 = vcombine.high %v729, %v761
    %v782 = vcombine.low %v738, %v770
    %v783 = vcombine.high %v738, %v770
    %v784 = vcombine.low %v745, %v777
    %v785 = vcombine.high %v745, %v777
    %v786 = vcombine.low %v268, %v357
    %v787 = vcombine.high %v268, %v357
    %v789 = vunpack.c.l.s4 1983009808
    %v790 = vunpack.c.0.s8 %v789
    %v791 = vlaneseq
    %v792 = vshrl.u32 %v791, 7
    %v793 = vsub.s32 %v790, %v792
    %v794 = vrot.slane %v786, %v793
    %v796 = vunpack.c.l.s4 1983009808
    %v797 = vunpack.c.0.s8 %v796
    %v798 = vlaneseq
    %v799 = vshrl.u32 %v798, 7
    %v800 = vsub.s32 %v797, %v799
    %v801 = vrot.slane %v787, %v800
    %v802 = vcombine.low %v345, %v369
    %v803 = vcombine.high %v345, %v369
    %v805 = vunpack.c.l.s4 1983009808
    %v806 = vunpack.c.0.s8 %v805
    %v807 = vlaneseq
    %v808 = vshrl.u32 %v807, 7
    %v809 = vsub.s32 %v806, %v808
    %v810 = vrot.slane %v802, %v809
    %v812 = vunpack.c.l.s4 1983009808
    %v813 = vunpack.c.0.s8 %v812
    %v814 = vlaneseq
    %v815 = vshrl.u32 %v814, 7
    %v816 = vsub.s32 %v813, %v815
    %v817 = vrot.slane %v803, %v816
    %v818 = vcombine.low %v381, %v405
    %v819 = vcombine.high %v381, %v405
    %v821 = vunpack.c.l.s4 1983009808
    %v822 = vunpack.c.0.s8 %v821
    %v823 = vlaneseq
    %v824 = vshrl.u32 %v823, 7
    %v825 = vsub.s32 %v822, %v824
    %v826 = vrot.slane %v818, %v825
    %v828 = vunpack.c.l.s4 1983009808
    %v829 = vunpack.c.0.s8 %v828
    %v830 = vlaneseq
    %v831 = vshrl.u32 %v830, 7
    %v832 = vsub.s32 %v829, %v831
    %v833 = vrot.slane %v819, %v832
    %v834 = vcombine.low %v393, %v417
    %v835 = vcombine.high %v393, %v417
    %v837 = vunpack.c.l.s4 1983009808
    %v838 = vunpack.c.0.s8 %v837
    %v839 = vlaneseq
    %v840 = vshrl.u32 %v839, 7
    %v841 = vsub.s32 %v838, %v840
    %v842 = vrot.slane %v834, %v841
    %v844 = vunpack.c.l.s4 1983009808
    %v845 = vunpack.c.0.s8 %v844
    %v846 = vlaneseq
    %v847 = vshrl.u32 %v846, 7
    %v848 = vsub.s32 %v845, %v847
    %v849 = vrot.slane %v835, %v848
    %v850 = vcombine.low %v794, %v810
    %v851 = vcombine.high %v794, %v810
    %v853 = vunpack.c.l.s4 1934713408
    %v854 = vunpack.c.0.s8 %v853
    %v855 = vlaneseq
    %v856 = vshrl.u32 %v855, 7
    %v857 = vsub.s32 %v854, %v856
    %v858 = vrot.slane %v850, %v857
    %v860 = vunpack.c.l.s4 1934713408
    %v861 = vunpack.c.0.s8 %v860
    %v862 = vlaneseq
    %v863 = vshrl.u32 %v862, 7
    %v864 = vsub.s32 %v861, %v863
    %v865 = vrot.slane %v851, %v864
    %v866 = vcombine.low %v801, %v817
    %v867 = vcombine.high %v801, %v817
    %v869 = vunpack.c.l.s4 1934713408
    %v870 = vunpack.c.0.s8 %v869
    %v871 = vlaneseq
    %v872 = vshrl.u32 %v871, 7
    %v873 = vsub.s32 %v870, %v872
    %v874 = vrot.slane %v866, %v873
    %v876 = vunpack.c.l.s4 1934713408
    %v877 = vunpack.c.0.s8 %v876
    %v878 = vlaneseq
    %v879 = vshrl.u32 %v878, 7
    %v880 = vsub.s32 %v877, %v879
    %v881 = vrot.slane %v867, %v880
    %v882 = vcombine.low %v826, %v842
    %v883 = vcombine.high %v826, %v842
    %v885 = vunpack.c.l.s4 1934713408
    %v886 = vunpack.c.0.s8 %v885
    %v887 = vlaneseq
    %v888 = vshrl.u32 %v887, 7
    %v889 = vsub.s32 %v886, %v888
    %v890 = vrot.slane %v882, %v889
    %v892 = vunpack.c.l.s4 1934713408
    %v893 = vunpack.c.0.s8 %v892
    %v894 = vlaneseq
    %v895 = vshrl.u32 %v894, 7
    %v896 = vsub.s32 %v893, %v895
    %v897 = vrot.slane %v883, %v896
    %v898 = vcombine.low %v833, %v849
    %v899 = vcombine.high %v833, %v849
    %v901 = vunpack.c.l.s4 1934713408
    %v902 = vunpack.c.0.s8 %v901
    %v903 = vlaneseq
    %v904 = vshrl.u32 %v903, 7
    %v905 = vsub.s32 %v902, %v904
    %v906 = vrot.slane %v898, %v905
    %v908 = vunpack.c.l.s4 1934713408
    %v909 = vunpack.c.0.s8 %v908
    %v910 = vlaneseq
    %v911 = vshrl.u32 %v910, 7
    %v912 = vsub.s32 %v909, %v911
    %v913 = vrot.slane %v899, %v912
    %v914 = vcombine.low %v858, %v890
    %v915 = vcombine.high %v858, %v890
    %v916 = vcombine.low %v865, %v897
    %v917 = vcombine.high %v865, %v897
    %v918 = vcombine.low %v874, %v906
    %v919 = vcombine.high %v874, %v906
    %v920 = vcombine.low %v881, %v913
    %v921 = vcombine.high %v881, %v913
    %v922 = vcombine.low %v269, %v445
    %v923 = vcombine.high %v269, %v445
    %v925 = vunpack.c.l.s4 1983009808
    %v926 = vunpack.c.0.s8 %v925
    %v927 = vlaneseq
    %v928 = vshrl.u32 %v927, 7
    %v929 = vsub.s32 %v926, %v928
    %v930 = vrot.slane %v922, %v929
    %v932 = vunpack.c.l.s4 1983009808
    %v933 = vunpack.c.0.s8 %v932
    %v934 = vlaneseq
    %v935 = vshrl.u32 %v934, 7
    %v936 = vsub.s32 %v933, %v935
    %v937 = vrot.slane %v923, %v936
    %v938 = vcombine.low %v433, %v457
    %v939 = vcombine.high %v433, %v457
    %v941 = vunpack.c.l.s4 1983009808
    %v942 = vunpack.c.0.s8 %v941
    %v943 = vlaneseq
    %v944 = vshrl.u32 %v943, 7
    %v945 = vsub.s32 %v942, %v944
    %v946 = vrot.slane %v938, %v945
    %v948 = vunpack.c.l.s4 1983009808
    %v949 = vunpack.c.0.s8 %v948
    %v950 = vlaneseq
    %v951 = vshrl.u32 %v950, 7
    %v952 = vsub.s32 %v949, %v951
    %v953 = vrot.slane %v939, %v952
    %v954 = vcombine.low %v469, %v493
    %v955 = vcombine.high %v469, %v493
    %v957 = vunpack.c.l.s4 1983009808
    %v958 = vunpack.c.0.s8 %v957
    %v959 = vlaneseq
    %v960 = vshrl.u32 %v959, 7
    %v961 = vsub.s32 %v958, %v960
    %v962 = vrot.slane %v954, %v961
    %v964 = vunpack.c.l.s4 1983009808
    %v965 = vunpack.c.0.s8 %v964
    %v966 = vlaneseq
    %v967 = vshrl.u32 %v966, 7
    %v968 = vsub.s32 %v965, %v967
    %v969 = vrot.slane %v955, %v968
    %v970 = vcombine.low %v481, %v505
    %v971 = vcombine.high %v481, %v505
    %v973 = vunpack.c.l.s4 1983009808
    %v974 = vunpack.c.0.s8 %v973
    %v975 = vlaneseq
    %v976 = vshrl.u32 %v975, 7
    %v977 = vsub.s32 %v974, %v976
    %v978 = vrot.slane %v970, %v977
    %v980 = vunpack.c.l.s4 1983009808
    %v981 = vunpack.c.0.s8 %v980
    %v982 = vlaneseq
    %v983 = vshrl.u32 %v982, 7
    %v984 = vsub.s32 %v981, %v983
    %v985 = vrot.slane %v971, %v984
    %v986 = vcombine.low %v930, %v946
    %v987 = vcombine.high %v930, %v946
    %v989 = vunpack.c.l.s4 1934713408
    %v990 = vunpack.c.0.s8 %v989
    %v991 = vlaneseq
    %v992 = vshrl.u32 %v991, 7
    %v993 = vsub.s32 %v990, %v992
    %v994 = vrot.slane %v986, %v993
    %v996 = vunpack.c.l.s4 1934713408
    %v997 = vunpack.c.0.s8 %v996
    %v998 = vlaneseq
    %v999 = vshrl.u32 %v998, 7
    %v1000 = vsub.s32 %v997, %v999
    %v1001 = vrot.slane %v987, %v1000
    %v1002 = vcombine.low %v937, %v953
    %v1003 = vcombine.high %v937, %v953
    %v1005 = vunpack.c.l.s4 1934713408
    %v1006 = vunpack.c.0.s8 %v1005
    %v1007 = vlaneseq
    %v1008 = vshrl.u32 %v1007, 7
    %v1009 = vsub.s32 %v1006, %v1008
    %v1010 = vrot.slane %v1002, %v1009
    %v1012 = vunpack.c.l.s4 1934713408
    %v1013 = vunpack.c.0.s8 %v1012
    %v1014 = vlaneseq
    %v1015 = vshrl.u32 %v1014, 7
    %v1016 = vsub.s32 %v1013, %v1015
    %v1017 = vrot.slane %v1003, %v1016
    %v1018 = vcombine.low %v962, %v978
    %v1019 = vcombine.high %v962, %v978
    %v1021 = vunpack.c.l.s4 1934713408
    %v1022 = vunpack.c.0.s8 %v1021
    %v1023 = vlaneseq
    %v1024 = vshrl.u32 %v1023, 7
    %v1025 = vsub.s32 %v1022, %v1024
    %v1026 = vrot.slane %v1018, %v1025
    %v1028 = vunpack.c.l.s4 1934713408
    %v1029 = vunpack.c.0.s8 %v1028
    %v1030 = vlaneseq
    %v1031 = vshrl.u32 %v1030, 7
    %v1032 = vsub.s32 %v1029, %v1031
    %v1033 = vrot.slane %v1019, %v1032
    %v1034 = vcombine.low %v969, %v985
    %v1035 = vcombine.high %v969, %v985
    %v1037 = vunpack.c.l.s4 1934713408
    %v1038 = vunpack.c.0.s8 %v1037
    %v1039 = vlaneseq
    %v1040 = vshrl.u32 %v1039, 7
    %v1041 = vsub.s32 %v1038, %v1040
    %v1042 = vrot.slane %v1034, %v1041
    %v1044 = vunpack.c.l.s4 1934713408
    %v1045 = vunpack.c.0.s8 %v1044
    %v1046 = vlaneseq
    %v1047 = vshrl.u32 %v1046, 7
    %v1048 = vsub.s32 %v1045, %v1047
    %v1049 = vrot.slane %v1035, %v1048
    %v1050 = vcombine.low %v994, %v1026
    %v1051 = vcombine.high %v994, %v1026
    %v1052 = vcombine.low %v1001, %v1033
    %v1053 = vcombine.high %v1001, %v1033
    %v1054 = vcombine.low %v1010, %v1042
    %v1055 = vcombine.high %v1010, %v1042
    %v1056 = vcombine.low %v1017, %v1049
    %v1057 = vcombine.high %v1017, %v1049
    %v1058 = vcombine.low %v270, %v359
    %v1059 = vcombine.high %v270, %v359
    %v1061 = vunpack.c.l.s4 1983009808
    %v1062 = vunpack.c.0.s8 %v1061
    %v1063 = vlaneseq
    %v1064 = vshrl.u32 %v1063, 7
    %v1065 = vsub.s32 %v1062, %v1064
    %v1066 = vrot.slane %v1058, %v1065
    %v1068 = vunpack.c.l.s4 1983009808
    %v1069 = vunpack.c.0.s8 %v1068
    %v1070 = vlaneseq
    %v1071 = vshrl.u32 %v1070, 7
    %v1072 = vsub.s32 %v1069, %v1071
    %v1073 = vrot.slane %v1059, %v1072
    %v1074 = vcombine.low %v347, %v371
    %v1075 = vcombine.high %v347, %v371
    %v1077 = vunpack.c.l.s4 1983009808
    %v1078 = vunpack.c.0.s8 %v1077
    %v1079 = vlaneseq
    %v1080 = vshrl.u32 %v1079, 7
    %v1081 = vsub.s32 %v1078, %v1080
    %v1082 = vrot.slane %v1074, %v1081
    %v1084 = vunpack.c.l.s4 1983009808
    %v1085 = vunpack.c.0.s8 %v1084
    %v1086 = vlaneseq
    %v1087 = vshrl.u32 %v1086, 7
    %v1088 = vsub.s32 %v1085, %v1087
    %v1089 = vrot.slane %v1075, %v1088
    %v1090 = vcombine.low %v383, %v407
    %v1091 = vcombine.high %v383, %v407
    %v1093 = vunpack.c.l.s4 1983009808
    %v1094 = vunpack.c.0.s8 %v1093
    %v1095 = vlaneseq
    %v1096 = vshrl.u32 %v1095, 7
    %v1097 = vsub.s32 %v1094, %v1096
    %v1098 = vrot.slane %v1090, %v1097
    %v1100 = vunpack.c.l.s4 1983009808
    %v1101 = vunpack.c.0.s8 %v1100
    %v1102 = vlaneseq
    %v1103 = vshrl.u32 %v1102, 7
    %v1104 = vsub.s32 %v1101, %v1103
    %v1105 = vrot.slane %v1091, %v1104
    %v1106 = vcombine.low %v395, %v419
    %v1107 = vcombine.high %v395, %v419
    %v1109 = vunpack.c.l.s4 1983009808
    %v1110 = vunpack.c.0.s8 %v1109
    %v1111 = vlaneseq
    %v1112 = vshrl.u32 %v1111, 7
    %v1113 = vsub.s32 %v1110, %v1112
    %v1114 = vrot.slane %v1106, %v1113
    %v1116 = vunpack.c.l.s4 1983009808
    %v1117 = vunpack.c.0.s8 %v1116
    %v1118 = vlaneseq
    %v1119 = vshrl.u32 %v1118, 7
    %v1120 = vsub.s32 %v1117, %v1119
    %v1121 = vrot.slane %v1107, %v1120
    %v1122 = vcombine.low %v1066, %v1082
    %v1123 = vcombine.high %v1066, %v1082
    %v1125 = vunpack.c.l.s4 1934713408
    %v1126 = vunpack.c.0.s8 %v1125
    %v1127 = vlaneseq
    %v1128 = vshrl.u32 %v1127, 7
    %v1129 = vsub.s32 %v1126, %v1128
    %v1130 = vrot.slane %v1122, %v1129
    %v1132 = vunpack.c.l.s4 1934713408
    %v1133 = vunpack.c.0.s8 %v1132
    %v1134 = vlaneseq
    %v1135 = vshrl.u32 %v1134, 7
    %v1136 = vsub.s32 %v1133, %v1135
    %v1137 = vrot.slane %v1123, %v1136
    %v1138 = vcombine.low %v1073, %v1089
    %v1139 = vcombine.high %v1073, %v1089
    %v1141 = vunpack.c.l.s4 1934713408
    %v1142 = vunpack.c.0.s8 %v1141
    %v1143 = vlaneseq
    %v1144 = vshrl.u32 %v1143, 7
    %v1145 = vsub.s32 %v1142, %v1144
    %v1146 = vrot.slane %v1138, %v1145
    %v1148 = vunpack.c.l.s4 1934713408
    %v1149 = vunpack.c.0.s8 %v1148
    %v1150 = vlaneseq
    %v1151 = vshrl.u32 %v1150, 7
    %v1152 = vsub.s32 %v1149, %v1151
    %v1153 = vrot.slane %v1139, %v1152
    %v1154 = vcombine.low %v1098, %v1114
    %v1155 = vcombine.high %v1098, %v1114
    %v1157 = vunpack.c.l.s4 1934713408
    %v1158 = vunpack.c.0.s8 %v1157
    %v1159 = vlaneseq
    %v1160 = vshrl.u32 %v1159, 7
    %v1161 = vsub.s32 %v1158, %v1160
    %v1162 = vrot.slane %v1154, %v1161
    %v1164 = vunpack.c.l.s4 1934713408
    %v1165 = vunpack.c.0.s8 %v1164
    %v1166 = vlaneseq
    %v1167 = vshrl.u32 %v1166, 7
    %v1168 = vsub.s32 %v1165, %v1167
    %v1169 = vrot.slane %v1155, %v1168
    %v1170 = vcombine.low %v1105, %v1121
    %v1171 = vcombine.high %v1105, %v1121
    %v1173 = vunpack.c.l.s4 1934713408
    %v1174 = vunpack.c.0.s8 %v1173
    %v1175 = vlaneseq
    %v1176 = vshrl.u32 %v1175, 7
    %v1177 = vsub.s32 %v1174, %v1176
    %v1178 = vrot.slane %v1170, %v1177
    %v1180 = vunpack.c.l.s4 1934713408
    %v1181 = vunpack.c.0.s8 %v1180
    %v1182 = vlaneseq
    %v1183 = vshrl.u32 %v1182, 7
    %v1184 = vsub.s32 %v1181, %v1183
    %v1185 = vrot.slane %v1171, %v1184
    %v1186 = vcombine.low %v1130, %v1162
    %v1187 = vcombine.high %v1130, %v1162
    %v1188 = vcombine.low %v1137, %v1169
    %v1189 = vcombine.high %v1137, %v1169
    %v1190 = vcombine.low %v1146, %v1178
    %v1191 = vcombine.high %v1146, %v1178
    %v1192 = vcombine.low %v1153, %v1185
    %v1193 = vcombine.high %v1153, %v1185
    %v1194 = vcombine.low %v271, %v447
    %v1195 = vcombine.high %v271, %v447
    %v1197 = vunpack.c.l.s4 1983009808
    %v1198 = vunpack.c.0.s8 %v1197
    %v1199 = vlaneseq
    %v1200 = vshrl.u32 %v1199, 7
    %v1201 = vsub.s32 %v1198, %v1200
    %v1202 = vrot.slane %v1194, %v1201
    %v1204 = vunpack.c.l.s4 1983009808
    %v1205 = vunpack.c.0.s8 %v1204
    %v1206 = vlaneseq
    %v1207 = vshrl.u32 %v1206, 7
    %v1208 = vsub.s32 %v1205, %v1207
    %v1209 = vrot.slane %v1195, %v1208
    %v1210 = vcombine.low %v435, %v459
    %v1211 = vcombine.high %v435, %v459
    %v1213 = vunpack.c.l.s4 1983009808
    %v1214 = vunpack.c.0.s8 %v1213
    %v1215 = vlaneseq
    %v1216 = vshrl.u32 %v1215, 7
    %v1217 = vsub.s32 %v1214, %v1216
    %v1218 = vrot.slane %v1210, %v1217
    %v1220 = vunpack.c.l.s4 1983009808
    %v1221 = vunpack.c.0.s8 %v1220
    %v1222 = vlaneseq
    %v1223 = vshrl.u32 %v1222, 7
    %v1224 = vsub.s32 %v1221, %v1223
    %v1225 = vrot.slane %v1211, %v1224
    %v1226 = vcombine.low %v471, %v495
    %v1227 = vcombine.high %v471, %v495
    %v1229 = vunpack.c.l.s4 1983009808
    %v1230 = vunpack.c.0.s8 %v1229
    %v1231 = vlaneseq
    %v1232 = vshrl.u32 %v1231, 7
    %v1233 = vsub.s32 %v1230, %v1232
    %v1234 = vrot.slane %v1226, %v1233
    %v1236 = vunpack.c.l.s4 1983009808
    %v1237 = vunpack.c.0.s8 %v1236
    %v1238 = vlaneseq
    %v1239 = vshrl.u32 %v1238, 7
    %v1240 = vsub.s32 %v1237, %v1239
    %v1241 = vrot.slane %v1227, %v1240
    %v1242 = vcombine.low %v483, %v507
    %v1243 = vcombine.high %v483, %v507
    %v1245 = vunpack.c.l.s4 1983009808
    %v1246 = vunpack.c.0.s8 %v1245
    %v1247 = vlaneseq
    %v1248 = vshrl.u32 %v1247, 7
    %v1249 = vsub.s32 %v1246, %v1248
    %v1250 = vrot.slane %v1242, %v1249
    %v1252 = vunpack.c.l.s4 1983009808
    %v1253 = vunpack.c.0.s8 %v1252
    %v1254 = vlaneseq
    %v1255 = vshrl.u32 %v1254, 7
    %v1256 = vsub.s32 %v1253, %v1255
    %v1257 = vrot.slane %v1243, %v1256
    %v1258 = vcombine.low %v1202, %v1218
    %v1259 = vcombine.high %v1202, %v1218
    %v1261 = vunpack.c.l.s4 1934713408
    %v1262 = vunpack.c.0.s8 %v1261
    %v1263 = vlaneseq
    %v1264 = vshrl.u32 %v1263, 7
    %v1265 = vsub.s32 %v1262, %v1264
    %v1266 = vrot.slane %v1258, %v1265
    %v1268 = vunpack.c.l.s4 1934713408
    %v1269 = vunpack.c.0.s8 %v1268
    %v1270 = vlaneseq
    %v1271 = vshrl.u32 %v1270, 7
    %v1272 = vsub.s32 %v1269, %v1271
    %v1273 = vrot.slane %v1259, %v1272
    %v1274 = vcombine.low %v1209, %v1225
    %v1275 = vcombine.high %v1209, %v1225
    %v1277 = vunpack.c.l.s4 1934713408
    %v1278 = vunpack.c.0.s8 %v1277
    %v1279 = vlaneseq
    %v1280 = vshrl.u32 %v1279, 7
    %v1281 = vsub.s32 %v1278, %v1280
    %v1282 = vrot.slane %v1274, %v1281
    %v1284 = vunpack.c.l.s4 1934713408
    %v1285 = vunpack.c.0.s8 %v1284
    %v1286 = vlaneseq
    %v1287 = vshrl.u32 %v1286, 7
    %v1288 = vsub.s32 %v1285, %v1287
    %v1289 = vrot.slane %v1275, %v1288
    %v1290 = vcombine.low %v1234, %v1250
    %v1291 = vcombine.high %v1234, %v1250
    %v1293 = vunpack.c.l.s4 1934713408
    %v1294 = vunpack.c.0.s8 %v1293
    %v1295 = vlaneseq
    %v1296 = vshrl.u32 %v1295, 7
    %v1297 = vsub.s32 %v1294, %v1296
    %v1298 = vrot.slane %v1290, %v1297
    %v1300 = vunpack.c.l.s4 1934713408
    %v1301 = vunpack.c.0.s8 %v1300
    %v1302 = vlaneseq
    %v1303 = vshrl.u32 %v1302, 7
    %v1304 = vsub.s32 %v1301, %v1303
    %v1305 = vrot.slane %v1291, %v1304
    %v1306 = vcombine.low %v1241, %v1257
    %v1307 = vcombine.high %v1241, %v1257
    %v1309 = vunpack.c.l.s4 1934713408
    %v1310 = vunpack.c.0.s8 %v1309
    %v1311 = vlaneseq
    %v1312 = vshrl.u32 %v1311, 7
    %v1313 = vsub.s32 %v1310, %v1312
    %v1314 = vrot.slane %v1306, %v1313
    %v1316 = vunpack.c.l.s4 1934713408
    %v1317 = vunpack.c.0.s8 %v1316
    %v1318 = vlaneseq
    %v1319 = vshrl.u32 %v1318, 7
    %v1320 = vsub.s32 %v1317, %v1319
    %v1321 = vrot.slane %v1307, %v1320
    %v1322 = vcombine.low %v1266, %v1298
    %v1323 = vcombine.high %v1266, %v1298
    %v1324 = vcombine.low %v1273, %v1305
    %v1325 = vcombine.high %v1273, %v1305
    %v1326 = vcombine.low %v1282, %v1314
    %v1327 = vcombine.high %v1282, %v1314
    %v1328 = vcombine.low %v1289, %v1321
    %v1329 = vcombine.high %v1289, %v1321
    %v1330 = vcombine.low %v272, %v361
    %v1331 = vcombine.high %v272, %v361
    %v1333 = vunpack.c.l.s4 1983009808
    %v1334 = vunpack.c.0.s8 %v1333
    %v1335 = vlaneseq
    %v1336 = vshrl.u32 %v1335, 7
    %v1337 = vsub.s32 %v1334, %v1336
    %v1338 = vrot.slane %v1330, %v1337
    %v1340 = vunpack.c.l.s4 1983009808
    %v1341 = vunpack.c.0.s8 %v1340
    %v1342 = vlaneseq
    %v1343 = vshrl.u32 %v1342, 7
    %v1344 = vsub.s32 %v1341, %v1343
    %v1345 = vrot.slane %v1331, %v1344
    %v1346 = vcombine.low %v349, %v373
    %v1347 = vcombine.high %v349, %v373
    %v1349 = vunpack.c.l.s4 1983009808
    %v1350 = vunpack.c.0.s8 %v1349
    %v1351 = vlaneseq
    %v1352 = vshrl.u32 %v1351, 7
    %v1353 = vsub.s32 %v1350, %v1352
    %v1354 = vrot.slane %v1346, %v1353
    %v1356 = vunpack.c.l.s4 1983009808
    %v1357 = vunpack.c.0.s8 %v1356
    %v1358 = vlaneseq
    %v1359 = vshrl.u32 %v1358, 7
    %v1360 = vsub.s32 %v1357, %v1359
    %v1361 = vrot.slane %v1347, %v1360
    %v1362 = vcombine.low %v385, %v409
    %v1363 = vcombine.high %v385, %v409
    %v1365 = vunpack.c.l.s4 1983009808
    %v1366 = vunpack.c.0.s8 %v1365
    %v1367 = vlaneseq
    %v1368 = vshrl.u32 %v1367, 7
    %v1369 = vsub.s32 %v1366, %v1368
    %v1370 = vrot.slane %v1362, %v1369
    %v1372 = vunpack.c.l.s4 1983009808
    %v1373 = vunpack.c.0.s8 %v1372
    %v1374 = vlaneseq
    %v1375 = vshrl.u32 %v1374, 7
    %v1376 = vsub.s32 %v1373, %v1375
    %v1377 = vrot.slane %v1363, %v1376
    %v1378 = vcombine.low %v397, %v421
    %v1379 = vcombine.high %v397, %v421
    %v1381 = vunpack.c.l.s4 1983009808
    %v1382 = vunpack.c.0.s8 %v1381
    %v1383 = vlaneseq
    %v1384 = vshrl.u32 %v1383, 7
    %v1385 = vsub.s32 %v1382, %v1384
    %v1386 = vrot.slane %v1378, %v1385
    %v1388 = vunpack.c.l.s4 1983009808
    %v1389 = vunpack.c.0.s8 %v1388
    %v1390 = vlaneseq
    %v1391 = vshrl.u32 %v1390, 7
    %v1392 = vsub.s32 %v1389, %v1391
    %v1393 = vrot.slane %v1379, %v1392
    %v1394 = vcombine.low %v1338, %v1354
    %v1395 = vcombine.high %v1338, %v1354
    %v1397 = vunpack.c.l.s4 1934713408
    %v1398 = vunpack.c.0.s8 %v1397
    %v1399 = vlaneseq
    %v1400 = vshrl.u32 %v1399, 7
    %v1401 = vsub.s32 %v1398, %v1400
    %v1402 = vrot.slane %v1394, %v1401
    %v1404 = vunpack.c.l.s4 1934713408
    %v1405 = vunpack.c.0.s8 %v1404
    %v1406 = vlaneseq
    %v1407 = vshrl.u32 %v1406, 7
    %v1408 = vsub.s32 %v1405, %v1407
    %v1409 = vrot.slane %v1395, %v1408
    %v1410 = vcombine.low %v1345, %v1361
    %v1411 = vcombine.high %v1345, %v1361
    %v1413 = vunpack.c.l.s4 1934713408
    %v1414 = vunpack.c.0.s8 %v1413
    %v1415 = vlaneseq
    %v1416 = vshrl.u32 %v1415, 7
    %v1417 = vsub.s32 %v1414, %v1416
    %v1418 = vrot.slane %v1410, %v1417
    %v1420 = vunpack.c.l.s4 1934713408
    %v1421 = vunpack.c.0.s8 %v1420
    %v1422 = vlaneseq
    %v1423 = vshrl.u32 %v1422, 7
    %v1424 = vsub.s32 %v1421, %v1423
    %v1425 = vrot.slane %v1411, %v1424
    %v1426 = vcombine.low %v1370, %v1386
    %v1427 = vcombine.high %v1370, %v1386
    %v1429 = vunpack.c.l.s4 1934713408
    %v1430 = vunpack.c.0.s8 %v1429
    %v1431 = vlaneseq
    %v1432 = vshrl.u32 %v1431, 7
    %v1433 = vsub.s32 %v1430, %v1432
    %v1434 = vrot.slane %v1426, %v1433
    %v1436 = vunpack.c.l.s4 1934713408
    %v1437 = vunpack.c.0.s8 %v1436
    %v1438 = vlaneseq
    %v1439 = vshrl.u32 %v1438, 7
    %v1440 = vsub.s32 %v1437, %v1439
    %v1441 = vrot.slane %v1427, %v1440
    %v1442 = vcombine.low %v1377, %v1393
    %v1443 = vcombine.high %v1377, %v1393
    %v1445 = vunpack.c.l.s4 1934713408
    %v1446 = vunpack.c.0.s8 %v1445
    %v1447 = vlaneseq
    %v1448 = vshrl.u32 %v1447, 7
    %v1449 = vsub.s32 %v1446, %v1448
    %v1450 = vrot.slane %v1442, %v1449
    %v1452 = vunpack.c.l.s4 1934713408
    %v1453 = vunpack.c.0.s8 %v1452
    %v1454 = vlaneseq
    %v1455 = vshrl.u32 %v1454, 7
    %v1456 = vsub.s32 %v1453, %v1455
    %v1457 = vrot.slane %v1443, %v1456
    %v1458 = vcombine.low %v1402, %v1434
    %v1459 = vcombine.high %v1402, %v1434
    %v1460 = vcombine.low %v1409, %v1441
    %v1461 = vcombine.high %v1409, %v1441
    %v1462 = vcombine.low %v1418, %v1450
    %v1463 = vcombine.high %v1418, %v1450
    %v1464 = vcombine.low %v1425, %v1457
    %v1465 = vcombine.high %v1425, %v1457
    %v1466 = vcombine.low %v273, %v449
    %v1467 = vcombine.high %v273, %v449
    %v1469 = vunpack.c.l.s4 1983009808
    %v1470 = vunpack.c.0.s8 %v1469
    %v1471 = vlaneseq
    %v1472 = vshrl.u32 %v1471, 7
    %v1473 = vsub.s32 %v1470, %v1472
    %v1474 = vrot.slane %v1466, %v1473
    %v1476 = vunpack.c.l.s4 1983009808
    %v1477 = vunpack.c.0.s8 %v1476
    %v1478 = vlaneseq
    %v1479 = vshrl.u32 %v1478, 7
    %v1480 = vsub.s32 %v1477, %v1479
    %v1481 = vrot.slane %v1467, %v1480
    %v1482 = vcombine.low %v437, %v461
    %v1483 = vcombine.high %v437, %v461
    %v1485 = vunpack.c.l.s4 1983009808
    %v1486 = vunpack.c.0.s8 %v1485
    %v1487 = vlaneseq
    %v1488 = vshrl.u32 %v1487, 7
    %v1489 = vsub.s32 %v1486, %v1488
    %v1490 = vrot.slane %v1482, %v1489
    %v1492 = vunpack.c.l.s4 1983009808
    %v1493 = vunpack.c.0.s8 %v1492
    %v1494 = vlaneseq
    %v1495 = vshrl.u32 %v1494, 7
    %v1496 = vsub.s32 %v1493, %v1495
    %v1497 = vrot.slane %v1483, %v1496
    %v1498 = vcombine.low %v473, %v497
    %v1499 = vcombine.high %v473, %v497
    %v1501 = vunpack.c.l.s4 1983009808
    %v1502 = vunpack.c.0.s8 %v1501
    %v1503 = vlaneseq
    %v1504 = vshrl.u32 %v1503, 7
    %v1505 = vsub.s32 %v1502, %v1504
    %v1506 = vrot.slane %v1498, %v1505
    %v1508 = vunpack.c.l.s4 1983009808
    %v1509 = vunpack.c.0.s8 %v1508
    %v1510 = vlaneseq
    %v1511 = vshrl.u32 %v1510, 7
    %v1512 = vsub.s32 %v1509, %v1511
    %v1513 = vrot.slane %v1499, %v1512
    %v1514 = vcombine.low %v485, %v509
    %v1515 = vcombine.high %v485, %v509
    %v1517 = vunpack.c.l.s4 1983009808
    %v1518 = vunpack.c.0.s8 %v1517
    %v1519 = vlaneseq
    %v1520 = vshrl.u32 %v1519, 7
    %v1521 = vsub.s32 %v1518, %v1520
    %v1522 = vrot.slane %v1514, %v1521
    %v1524 = vunpack.c.l.s4 1983009808
    %v1525 = vunpack.c.0.s8 %v1524
    %v1526 = vlaneseq
    %v1527 = vshrl.u32 %v1526, 7
    %v1528 = vsub.s32 %v1525, %v1527
    %v1529 = vrot.slane %v1515, %v1528
    %v1530 = vcombine.low %v1474, %v1490
    %v1531 = vcombine.high %v1474, %v1490
    %v1533 = vunpack.c.l.s4 1934713408
    %v1534 = vunpack.c.0.s8 %v1533
    %v1535 = vlaneseq
    %v1536 = vshrl.u32 %v1535, 7
    %v1537 = vsub.s32 %v1534, %v1536
    %v1538 = vrot.slane %v1530, %v1537
    %v1540 = vunpack.c.l.s4 1934713408
    %v1541 = vunpack.c.0.s8 %v1540
    %v1542 = vlaneseq
    %v1543 = vshrl.u32 %v1542, 7
    %v1544 = vsub.s32 %v1541, %v1543
    %v1545 = vrot.slane %v1531, %v1544
    %v1546 = vcombine.low %v1481, %v1497
    %v1547 = vcombine.high %v1481, %v1497
    %v1549 = vunpack.c.l.s4 1934713408
    %v1550 = vunpack.c.0.s8 %v1549
    %v1551 = vlaneseq
    %v1552 = vshrl.u32 %v1551, 7
    %v1553 = vsub.s32 %v1550, %v1552
    %v1554 = vrot.slane %v1546, %v1553
    %v1556 = vunpack.c.l.s4 1934713408
    %v1557 = vunpack.c.0.s8 %v1556
    %v1558 = vlaneseq
    %v1559 = vshrl.u32 %v1558, 7
    %v1560 = vsub.s32 %v1557, %v1559
    %v1561 = vrot.slane %v1547, %v1560
    %v1562 = vcombine.low %v1506, %v1522
    %v1563 = vcombine.high %v1506, %v1522
    %v1565 = vunpack.c.l.s4 1934713408
    %v1566 = vunpack.c.0.s8 %v1565
    %v1567 = vlaneseq
    %v1568 = vshrl.u32 %v1567, 7
    %v1569 = vsub.s32 %v1566, %v1568
    %v1570 = vrot.slane %v1562, %v1569
    %v1572 = vunpack.c.l.s4 1934713408
    %v1573 = vunpack.c.0.s8 %v1572
    %v1574 = vlaneseq
    %v1575 = vshrl.u32 %v1574, 7
    %v1576 = vsub.s32 %v1573, %v1575
    %v1577 = vrot.slane %v1563, %v1576
    %v1578 = vcombine.low %v1513, %v1529
    %v1579 = vcombine.high %v1513, %v1529
    %v1581 = vunpack.c.l.s4 1934713408
    %v1582 = vunpack.c.0.s8 %v1581
    %v1583 = vlaneseq
    %v1584 = vshrl.u32 %v1583, 7
    %v1585 = vsub.s32 %v1582, %v1584
    %v1586 = vrot.slane %v1578, %v1585
    %v1588 = vunpack.c.l.s4 1934713408
    %v1589 = vunpack.c.0.s8 %v1588
    %v1590 = vlaneseq
    %v1591 = vshrl.u32 %v1590, 7
    %v1592 = vsub.s32 %v1589, %v1591
    %v1593 = vrot.slane %v1579, %v1592
    %v1594 = vcombine.low %v1538, %v1570
    %v1595 = vcombine.high %v1538, %v1570
    %v1596 = vcombine.low %v1545, %v1577
    %v1597 = vcombine.high %v1545, %v1577
    %v1598 = vcombine.low %v1554, %v1586
    %v1599 = vcombine.high %v1554, %v1586
    %v1600 = vcombine.low %v1561, %v1593
    %v1601 = vcombine.high %v1561, %v1593
    %vm1602 = vcmask 130048
    %v1603 = vsel %vm1602, %v642, -inf
    %v1604 = vsel %vm1602, %v778, -inf
    %v1605 = vmax.f32 %v1603, %v1604
    %v1606 = vrot.slane %v1605, 4
    %v1607 = vmax.f32 %v1605, %v1606
    %v1608 = vrot.slane %v1607, 2
    %v1609 = vmax.f32 %v1607, %v1608
    %v1610 = vrot.slane %v1609, 1
    %v1611 = vmax.f32 %v1609, %v1610
    %v1612 = vsel %vm1602, %v643, -inf
    %v1613 = vsel %vm1602, %v779, -inf
    %v1614 = vmax.f32 %v1612, %v1613
    %v1615 = vrot.slane %v1614, 4
    %v1616 = vmax.f32 %v1614, %v1615
    %v1617 = vrot.slane %v1616, 2
    %v1618 = vmax.f32 %v1616, %v1617
    %v1619 = vrot.slane %v1618, 1
    %v1620 = vmax.f32 %v1618, %v1619
    %v1621 = vsel %vm1602, %v644, -inf
    %v1622 = vsel %vm1602, %v780, -inf
    %v1623 = vmax.f32 %v1621, %v1622
    %v1624 = vrot.slane %v1623, 4
    %v1625 = vmax.f32 %v1623, %v1624
    %v1626 = vrot.slane %v1625, 2
    %v1627 = vmax.f32 %v1625, %v1626
    %v1628 = vrot.slane %v1627, 1
    %v1629 = vmax.f32 %v1627, %v1628
    %v1630 = vsel %vm1602, %v645, -inf
    %v1631 = vsel %vm1602, %v781, -inf
    %v1632 = vmax.f32 %v1630, %v1631
    %v1633 = vrot.slane %v1632, 4
    %v1634 = vmax.f32 %v1632, %v1633
    %v1635 = vrot.slane %v1634, 2
    %v1636 = vmax.f32 %v1634, %v1635
    %v1637 = vrot.slane %v1636, 1
    %v1638 = vmax.f32 %v1636, %v1637
    %v1639 = vsel %vm1602, %v646, -inf
    %v1640 = vsel %vm1602, %v782, -inf
    %v1641 = vmax.f32 %v1639, %v1640
    %v1642 = vrot.slane %v1641, 4
    %v1643 = vmax.f32 %v1641, %v1642
    %v1644 = vrot.slane %v1643, 2
    %v1645 = vmax.f32 %v1643, %v1644
    %v1646 = vrot.slane %v1645, 1
    %v1647 = vmax.f32 %v1645, %v1646
    %v1648 = vsel %vm1602, %v647, -inf
    %v1649 = vsel %vm1602, %v783, -inf
    %v1650 = vmax.f32 %v1648, %v1649
    %v1651 = vrot.slane %v1650, 4
    %v1652 = vmax.f32 %v1650, %v1651
    %v1653 = vrot.slane %v1652, 2
    %v1654 = vmax.f32 %v1652, %v1653
    %v1655 = vrot.slane %v1654, 1
    %v1656 = vmax.f32 %v1654, %v1655
    %v1657 = vsel %vm1602, %v648, -inf
    %v1658 = vsel %vm1602, %v784, -inf
    %v1659 = vmax.f32 %v1657, %v1658
    %v1660 = vrot.slane %v1659, 4
    %v1661 = vmax.f32 %v1659, %v1660
    %v1662 = vrot.slane %v1661, 2
    %v1663 = vmax.f32 %v1661, %v1662
    %v1664 = vrot.slane %v1663, 1
    %v1665 = vmax.f32 %v1663, %v1664
    %v1666 = vsel %vm1602, %v649, -inf
    %v1667 = vsel %vm1602, %v785, -inf
    %v1668 = vmax.f32 %v1666, %v1667
    %v1669 = vrot.slane %v1668, 4
    %v1670 = vmax.f32 %v1668, %v1669
    %v1671 = vrot.slane %v1670, 2
    %v1672 = vmax.f32 %v1670, %v1671
    %v1673 = vrot.slane %v1672, 1
    %v1674 = vmax.f32 %v1672, %v1673
    %v1675 = vsel %vm1602, %v914, -inf
    %v1676 = vsel %vm1602, %v1050, -inf
    %v1677 = vmax.f32 %v1675, %v1676
    %v1678 = vrot.slane %v1677, 4
    %v1679 = vmax.f32 %v1677, %v1678
    %v1680 = vrot.slane %v1679, 2
    %v1681 = vmax.f32 %v1679, %v1680
    %v1682 = vrot.slane %v1681, 1
    %v1683 = vmax.f32 %v1681, %v1682
    %v1684 = vsel %vm1602, %v915, -inf
    %v1685 = vsel %vm1602, %v1051, -inf
    %v1686 = vmax.f32 %v1684, %v1685
    %v1687 = vrot.slane %v1686, 4
    %v1688 = vmax.f32 %v1686, %v1687
    %v1689 = vrot.slane %v1688, 2
    %v1690 = vmax.f32 %v1688, %v1689
    %v1691 = vrot.slane %v1690, 1
    %v1692 = vmax.f32 %v1690, %v1691
    %v1693 = vsel %vm1602, %v916, -inf
    %v1694 = vsel %vm1602, %v1052, -inf
    %v1695 = vmax.f32 %v1693, %v1694
    %v1696 = vrot.slane %v1695, 4
    %v1697 = vmax.f32 %v1695, %v1696
    %v1698 = vrot.slane %v1697, 2
    %v1699 = vmax.f32 %v1697, %v1698
    %v1700 = vrot.slane %v1699, 1
    %v1701 = vmax.f32 %v1699, %v1700
    %v1702 = vsel %vm1602, %v917, -inf
    %v1703 = vsel %vm1602, %v1053, -inf
    %v1704 = vmax.f32 %v1702, %v1703
    %v1705 = vrot.slane %v1704, 4
    %v1706 = vmax.f32 %v1704, %v1705
    %v1707 = vrot.slane %v1706, 2
    %v1708 = vmax.f32 %v1706, %v1707
    %v1709 = vrot.slane %v1708, 1
    %v1710 = vmax.f32 %v1708, %v1709
    %v1711 = vsel %vm1602, %v918, -inf
    %v1712 = vsel %vm1602, %v1054, -inf
    %v1713 = vmax.f32 %v1711, %v1712
    %v1714 = vrot.slane %v1713, 4
    %v1715 = vmax.f32 %v1713, %v1714
    %v1716 = vrot.slane %v1715, 2
    %v1717 = vmax.f32 %v1715, %v1716
    %v1718 = vrot.slane %v1717, 1
    %v1719 = vmax.f32 %v1717, %v1718
    %v1720 = vsel %vm1602, %v919, -inf
    %v1721 = vsel %vm1602, %v1055, -inf
    %v1722 = vmax.f32 %v1720, %v1721
    %v1723 = vrot.slane %v1722, 4
    %v1724 = vmax.f32 %v1722, %v1723
    %v1725 = vrot.slane %v1724, 2
    %v1726 = vmax.f32 %v1724, %v1725
    %v1727 = vrot.slane %v1726, 1
    %v1728 = vmax.f32 %v1726, %v1727
    %v1729 = vsel %vm1602, %v920, -inf
    %v1730 = vsel %vm1602, %v1056, -inf
    %v1731 = vmax.f32 %v1729, %v1730
    %v1732 = vrot.slane %v1731, 4
    %v1733 = vmax.f32 %v1731, %v1732
    %v1734 = vrot.slane %v1733, 2
    %v1735 = vmax.f32 %v1733, %v1734
    %v1736 = vrot.slane %v1735, 1
    %v1737 = vmax.f32 %v1735, %v1736
    %v1738 = vsel %vm1602, %v921, -inf
    %v1739 = vsel %vm1602, %v1057, -inf
    %v1740 = vmax.f32 %v1738, %v1739
    %v1741 = vrot.slane %v1740, 4
    %v1742 = vmax.f32 %v1740, %v1741
    %v1743 = vrot.slane %v1742, 2
    %v1744 = vmax.f32 %v1742, %v1743
    %v1745 = vrot.slane %v1744, 1
    %v1746 = vmax.f32 %v1744, %v1745
    %v1747 = vsel %vm1602, %v1186, -inf
    %v1748 = vsel %vm1602, %v1322, -inf
    %v1749 = vmax.f32 %v1747, %v1748
    %v1750 = vrot.slane %v1749, 4
    %v1751 = vmax.f32 %v1749, %v1750
    %v1752 = vrot.slane %v1751, 2
    %v1753 = vmax.f32 %v1751, %v1752
    %v1754 = vrot.slane %v1753, 1
    %v1755 = vmax.f32 %v1753, %v1754
    %v1756 = vsel %vm1602, %v1187, -inf
    %v1757 = vsel %vm1602, %v1323, -inf
    %v1758 = vmax.f32 %v1756, %v1757
    %v1759 = vrot.slane %v1758, 4
    %v1760 = vmax.f32 %v1758, %v1759
    %v1761 = vrot.slane %v1760, 2
    %v1762 = vmax.f32 %v1760, %v1761
    %v1763 = vrot.slane %v1762, 1
    %v1764 = vmax.f32 %v1762, %v1763
    %v1765 = vsel %vm1602, %v1188, -inf
    %v1766 = vsel %vm1602, %v1324, -inf
    %v1767 = vmax.f32 %v1765, %v1766
    %v1768 = vrot.slane %v1767, 4
    %v1769 = vmax.f32 %v1767, %v1768
    %v1770 = vrot.slane %v1769, 2
    %v1771 = vmax.f32 %v1769, %v1770
    %v1772 = vrot.slane %v1771, 1
    %v1773 = vmax.f32 %v1771, %v1772
    %v1774 = vsel %vm1602, %v1189, -inf
    %v1775 = vsel %vm1602, %v1325, -inf
    %v1776 = vmax.f32 %v1774, %v1775
    %v1777 = vrot.slane %v1776, 4
    %v1778 = vmax.f32 %v1776, %v1777
    %v1779 = vrot.slane %v1778, 2
    %v1780 = vmax.f32 %v1778, %v1779
    %v1781 = vrot.slane %v1780, 1
    %v1782 = vmax.f32 %v1780, %v1781
    %v1783 = vsel %vm1602, %v1190, -inf
    %v1784 = vsel %vm1602, %v1326, -inf
    %v1785 = vmax.f32 %v1783, %v1784
    %v1786 = vrot.slane %v1785, 4
    %v1787 = vmax.f32 %v1785, %v1786
    %v1788 = vrot.slane %v1787, 2
    %v1789 = vmax.f32 %v1787, %v1788
    %v1790 = vrot.slane %v1789, 1
    %v1791 = vmax.f32 %v1789, %v1790
    %v1792 = vsel %vm1602, %v1191, -inf
    %v1793 = vsel %vm1602, %v1327, -inf
    %v1794 = vmax.f32 %v1792, %v1793
    %v1795 = vrot.slane %v1794, 4
    %v1796 = vmax.f32 %v1794, %v1795
    %v1797 = vrot.slane %v1796, 2
    %v1798 = vmax.f32 %v1796, %v1797
    %v1799 = vrot.slane %v1798, 1
    %v1800 = vmax.f32 %v1798, %v1799
    %v1801 = vsel %vm1602, %v1192, -inf
    %v1802 = vsel %vm1602, %v1328, -inf
    %v1803 = vmax.f32 %v1801, %v1802
    %v1804 = vrot.slane %v1803, 4
    %v1805 = vmax.f32 %v1803, %v1804
    %v1806 = vrot.slane %v1805, 2
    %v1807 = vmax.f32 %v1805, %v1806
    %v1808 = vrot.slane %v1807, 1
    %v1809 = vmax.f32 %v1807, %v1808
    %v1810 = vsel %vm1602, %v1193, -inf
    %v1811 = vsel %vm1602, %v1329, -inf
    %v1812 = vmax.f32 %v1810, %v1811
    %v1813 = vrot.slane %v1812, 4
    %v1814 = vmax.f32 %v1812, %v1813
    %v1815 = vrot.slane %v1814, 2
    %v1816 = vmax.f32 %v1814, %v1815
    %v1817 = vrot.slane %v1816, 1
    %v1818 = vmax.f32 %v1816, %v1817
    %v1819 = vsel %vm1602, %v1458, -inf
    %v1820 = vsel %vm1602, %v1594, -inf
    %v1821 = vmax.f32 %v1819, %v1820
    %v1822 = vrot.slane %v1821, 4
    %v1823 = vmax.f32 %v1821, %v1822
    %v1824 = vrot.slane %v1823, 2
    %v1825 = vmax.f32 %v1823, %v1824
    %v1826 = vrot.slane %v1825, 1
    %v1827 = vmax.f32 %v1825, %v1826
    %v1828 = vsel %vm1602, %v1459, -inf
    %v1829 = vsel %vm1602, %v1595, -inf
    %v1830 = vmax.f32 %v1828, %v1829
    %v1831 = vrot.slane %v1830, 4
    %v1832 = vmax.f32 %v1830, %v1831
    %v1833 = vrot.slane %v1832, 2
    %v1834 = vmax.f32 %v1832, %v1833
    %v1835 = vrot.slane %v1834, 1
    %v1836 = vmax.f32 %v1834, %v1835
    %v1837 = vsel %vm1602, %v1460, -inf
    %v1838 = vsel %vm1602, %v1596, -inf
    %v1839 = vmax.f32 %v1837, %v1838
    %v1840 = vrot.slane %v1839, 4
    %v1841 = vmax.f32 %v1839, %v1840
    %v1842 = vrot.slane %v1841, 2
    %v1843 = vmax.f32 %v1841, %v1842
    %v1844 = vrot.slane %v1843, 1
    %v1845 = vmax.f32 %v1843, %v1844
    %v1846 = vsel %vm1602, %v1461, -inf
    %v1847 = vsel %vm1602, %v1597, -inf
    %v1848 = vmax.f32 %v1846, %v1847
    %v1849 = vrot.slane %v1848, 4
    %v1850 = vmax.f32 %v1848, %v1849
    %v1851 = vrot.slane %v1850, 2
    %v1852 = vmax.f32 %v1850, %v1851
    %v1853 = vrot.slane %v1852, 1
    %v1854 = vmax.f32 %v1852, %v1853
    %v1855 = vsel %vm1602, %v1462, -inf
    %v1856 = vsel %vm1602, %v1598, -inf
    %v1857 = vmax.f32 %v1855, %v1856
    %v1858 = vrot.slane %v1857, 4
    %v1859 = vmax.f32 %v1857, %v1858
    %v1860 = vrot.slane %v1859, 2
    %v1861 = vmax.f32 %v1859, %v1860
    %v1862 = vrot.slane %v1861, 1
    %v1863 = vmax.f32 %v1861, %v1862
    %v1864 = vsel %vm1602, %v1463, -inf
    %v1865 = vsel %vm1602, %v1599, -inf
    %v1866 = vmax.f32 %v1864, %v1865
    %v1867 = vrot.slane %v1866, 4
    %v1868 = vmax.f32 %v1866, %v1867
    %v1869 = vrot.slane %v1868, 2
    %v1870 = vmax.f32 %v1868, %v1869
    %v1871 = vrot.slane %v1870, 1
    %v1872 = vmax.f32 %v1870, %v1871
    %v1873 = vsel %vm1602, %v1464, -inf
    %v1874 = vsel %vm1602, %v1600, -inf
    %v1875 = vmax.f32 %v1873, %v1874
    %v1876 = vrot.slane %v1875, 4
    %v1877 = vmax.f32 %v1875, %v1876
    %v1878 = vrot.slane %v1877, 2
    %v1879 = vmax.f32 %v1877, %v1878
    %v1880 = vrot.slane %v1879, 1
    %v1881 = vmax.f32 %v1879, %v1880
    %v1882 = vsel %vm1602, %v1465, -inf
    %v1883 = vsel %vm1602, %v1601, -inf
    %v1884 = vmax.f32 %v1882, %v1883
    %v1885 = vrot.slane %v1884, 4
    %v1886 = vmax.f32 %v1884, %v1885
    %v1887 = vrot.slane %v1886, 2
    %v1888 = vmax.f32 %v1886, %v1887
    %v1889 = vrot.slane %v1888, 1
    %v1890 = vmax.f32 %v1888, %v1889
    %v1923 = vsel %vm328, %v1620, %v1611
    %v1924 = vsel %vm322, %v1629, %v1923
    %v1925 = vsel %vm330, %v1638, %v1924
    %v1926 = vsel %vm323, %v1647, %v1925
    %v1927 = vsel %vm332, %v1656, %v1926
    %v1928 = vsel %vm325, %v1665, %v1927
    %v1929 = vsel %vm334, %v1674, %v1928
    %v1930 = vsel %vm328, %v1692, %v1683
    %v1931 = vsel %vm322, %v1701, %v1930
    %v1932 = vsel %vm330, %v1710, %v1931
    %v1933 = vsel %vm323, %v1719, %v1932
    %v1934 = vsel %vm332, %v1728, %v1933
    %v1935 = vsel %vm325, %v1737, %v1934
    %v1936 = vsel %vm334, %v1746, %v1935
    %v1937 = vsel %vm328, %v1764, %v1755
    %v1938 = vsel %vm322, %v1773, %v1937
    %v1939 = vsel %vm330, %v1782, %v1938
    %v1940 = vsel %vm323, %v1791, %v1939
    %v1941 = vsel %vm332, %v1800, %v1940
    %v1942 = vsel %vm325, %v1809, %v1941
    %v1943 = vsel %vm334, %v1818, %v1942
    %v1944 = vsel %vm328, %v1836, %v1827
    %v1945 = vsel %vm322, %v1845, %v1944
    %v1946 = vsel %vm330, %v1854, %v1945
    %v1947 = vsel %vm323, %v1863, %v1946
    %v1948 = vsel %vm332, %v1872, %v1947
    %v1949 = vsel %vm325, %v1881, %v1948
    %v1950 = vsel %vm334, %v1890, %v1949
    %v1955 = vcombine.high %v1929, 0.0
    %v1957 = vunpack.c.l.s4 1983009808
    %v1958 = vunpack.c.0.s8 %v1957
    %v1959 = vlaneseq
    %v1960 = vshrl.u32 %v1959, 7
    %v1961 = vsub.s32 %v1958, %v1960
    %v1962 = vrot.slane %v1929, %v1961
    %v1964 = vunpack.c.l.s4 1983009808
    %v1965 = vunpack.c.0.s8 %v1964
    %v1966 = vlaneseq
    %v1967 = vshrl.u32 %v1966, 7
    %v1968 = vsub.s32 %v1965, %v1967
    %v1969 = vrot.slane %v1955, %v1968
    %v1970 = vcombine.high %v1943, 0.0
    %v1972 = vunpack.c.l.s4 1983009808
    %v1973 = vunpack.c.0.s8 %v1972
    %v1974 = vlaneseq
    %v1975 = vshrl.u32 %v1974, 7
    %v1976 = vsub.s32 %v1973, %v1975
    %v1977 = vrot.slane %v1943, %v1976
    %v1979 = vunpack.c.l.s4 1983009808
    %v1980 = vunpack.c.0.s8 %v1979
    %v1981 = vlaneseq
    %v1982 = vshrl.u32 %v1981, 7
    %v1983 = vsub.s32 %v1980, %v1982
    %v1984 = vrot.slane %v1970, %v1983
    %v1985 = vcombine.low %v1962, %v1977
    %v1986 = vcombine.high %v1962, %v1977
    %v1988 = vunpack.c.l.s4 1934713408
    %v1989 = vunpack.c.0.s8 %v1988
    %v1990 = vlaneseq
    %v1991 = vshrl.u32 %v1990, 7
    %v1992 = vsub.s32 %v1989, %v1991
    %v1993 = vrot.slane %v1985, %v1992
    %v1995 = vunpack.c.l.s4 1934713408
    %v1996 = vunpack.c.0.s8 %v1995
    %v1997 = vlaneseq
    %v1998 = vshrl.u32 %v1997, 7
    %v1999 = vsub.s32 %v1996, %v1998
    %v2000 = vrot.slane %v1986, %v1999
    %v2001 = vcombine.low %v1969, %v1984
    %v2002 = vcombine.high %v1969, %v1984
    %v2004 = vunpack.c.l.s4 1934713408
    %v2005 = vunpack.c.0.s8 %v2004
    %v2006 = vlaneseq
    %v2007 = vshrl.u32 %v2006, 7
    %v2008 = vsub.s32 %v2005, %v2007
    %v2009 = vrot.slane %v2001, %v2008
    %v2011 = vunpack.c.l.s4 1934713408
    %v2012 = vunpack.c.0.s8 %v2011
    %v2013 = vlaneseq
    %v2014 = vshrl.u32 %v2013, 7
    %v2015 = vsub.s32 %v2012, %v2014
    %v2016 = vrot.slane %v2002, %v2015
    %v2017 = vcombine.high %v1993, 0.0
    %v2018 = vcombine.high %v2000, 0.0
    %v2019 = vcombine.high %v2009, 0.0
    %v2020 = vcombine.high %v2016, 0.0
    %v2021 = vcombine.high %v1936, 0.0
    %v2023 = vunpack.c.l.s4 1983009808
    %v2024 = vunpack.c.0.s8 %v2023
    %v2025 = vlaneseq
    %v2026 = vshrl.u32 %v2025, 7
    %v2027 = vsub.s32 %v2024, %v2026
    %v2028 = vrot.slane %v1936, %v2027
    %v2030 = vunpack.c.l.s4 1983009808
    %v2031 = vunpack.c.0.s8 %v2030
    %v2032 = vlaneseq
    %v2033 = vshrl.u32 %v2032, 7
    %v2034 = vsub.s32 %v2031, %v2033
    %v2035 = vrot.slane %v2021, %v2034
    %v2036 = vcombine.high %v1950, 0.0
    %v2038 = vunpack.c.l.s4 1983009808
    %v2039 = vunpack.c.0.s8 %v2038
    %v2040 = vlaneseq
    %v2041 = vshrl.u32 %v2040, 7
    %v2042 = vsub.s32 %v2039, %v2041
    %v2043 = vrot.slane %v1950, %v2042
    %v2045 = vunpack.c.l.s4 1983009808
    %v2046 = vunpack.c.0.s8 %v2045
    %v2047 = vlaneseq
    %v2048 = vshrl.u32 %v2047, 7
    %v2049 = vsub.s32 %v2046, %v2048
    %v2050 = vrot.slane %v2036, %v2049
    %v2051 = vcombine.low %v2028, %v2043
    %v2052 = vcombine.high %v2028, %v2043
    %v2054 = vunpack.c.l.s4 1934713408
    %v2055 = vunpack.c.0.s8 %v2054
    %v2056 = vlaneseq
    %v2057 = vshrl.u32 %v2056, 7
    %v2058 = vsub.s32 %v2055, %v2057
    %v2059 = vrot.slane %v2051, %v2058
    %v2061 = vunpack.c.l.s4 1934713408
    %v2062 = vunpack.c.0.s8 %v2061
    %v2063 = vlaneseq
    %v2064 = vshrl.u32 %v2063, 7
    %v2065 = vsub.s32 %v2062, %v2064
    %v2066 = vrot.slane %v2052, %v2065
    %v2067 = vcombine.low %v2035, %v2050
    %v2068 = vcombine.high %v2035, %v2050
    %v2070 = vunpack.c.l.s4 1934713408
    %v2071 = vunpack.c.0.s8 %v2070
    %v2072 = vlaneseq
    %v2073 = vshrl.u32 %v2072, 7
    %v2074 = vsub.s32 %v2071, %v2073
    %v2075 = vrot.slane %v2067, %v2074
    %v2077 = vunpack.c.l.s4 1934713408
    %v2078 = vunpack.c.0.s8 %v2077
    %v2079 = vlaneseq
    %v2080 = vshrl.u32 %v2079, 7
    %v2081 = vsub.s32 %v2078, %v2080
    %v2082 = vrot.slane %v2068, %v2081
    %v2083 = vcombine.high %v2059, 0.0
    %v2084 = vcombine.high %v2066, 0.0
    %v2085 = vcombine.high %v2075, 0.0
    %v2086 = vcombine.high %v2082, 0.0
    %2088 = vrot.lane.b32.xlu0 %v2017, 16
    %v2089 = vpop.permute.xlu0 %2088
    %2092 = vrot.lane.b32.xlu0 %v2000, 32
    %v2093 = vpop.permute.xlu0 %2092
    %2096 = vrot.lane.b32.xlu0 %v2018, 48
    %v2097 = vpop.permute.xlu0 %2096
    %2100 = vrot.lane.b32.xlu0 %v2009, 64
    %v2101 = vpop.permute.xlu0 %2100
    %2104 = vrot.lane.b32.xlu0 %v2019, 80
    %v2105 = vpop.permute.xlu0 %2104
    %2108 = vrot.lane.b32.xlu0 %v2016, 96
    %v2109 = vpop.permute.xlu0 %2108
    %2112 = vrot.lane.b32.xlu0 %v2020, 112
    %v2113 = vpop.permute.xlu0 %2112
    %2116 = vrot.lane.b32.xlu0 %v2083, 16
    %v2117 = vpop.permute.xlu0 %2116
    %2120 = vrot.lane.b32.xlu0 %v2066, 32
    %v2121 = vpop.permute.xlu0 %2120
    %2124 = vrot.lane.b32.xlu0 %v2084, 48
    %v2125 = vpop.permute.xlu0 %2124
    %2128 = vrot.lane.b32.xlu0 %v2075, 64
    %v2129 = vpop.permute.xlu0 %2128
    %2132 = vrot.lane.b32.xlu0 %v2085, 80
    %v2133 = vpop.permute.xlu0 %2132
    %2136 = vrot.lane.b32.xlu0 %v2082, 96
    %v2137 = vpop.permute.xlu0 %2136
    %2140 = vrot.lane.b32.xlu0 %v2086, 112
    %v2141 = vpop.permute.xlu0 %2140
    %v2143 = vsel %vm1602, %v1993, %v2089
    %vm2144 = vcmask 261120
    %v2145 = vsel %vm2144, %v2143, %v2093
    %vm2146 = vcmask 392192
    %v2147 = vsel %vm2146, %v2145, %v2097
    %vm2148 = vcmask 523264
    %v2149 = vsel %vm2148, %v2147, %v2101
    %vm2150 = vcmask 654336
    %v2151 = vsel %vm2150, %v2149, %v2105
    %vm2152 = vcmask 785408
    %v2153 = vsel %vm2152, %v2151, %v2109
    %vm2154 = vcmask 916480
    %v2155 = vsel %vm2154, %v2153, %v2113
    %v2156 = vsel %vm1602, %v2059, %v2117
    %v2157 = vsel %vm2144, %v2156, %v2121
    %v2158 = vsel %vm2146, %v2157, %v2125
    %v2159 = vsel %vm2148, %v2158, %v2129
    %v2160 = vsel %vm2150, %v2159, %v2133
    %v2161 = vsel %vm2152, %v2160, %v2137
    %v2162 = vsel %vm2154, %v2161, %v2141
    %v2165 = vcombine.low %v2155, %v2162
    %v2167 = vunpack.c.l.s4 1983009808
    %v2168 = vunpack.c.0.s8 %v2167
    %v2169 = vlaneseq
    %v2170 = vshrl.u32 %v2169, 7
    %v2171 = vsub.s32 %v2168, %v2170
    %v2172 = vrot.slane %v2165, %v2171
    %2174 = vst [vmem:[#allocation8] sm:$0xf] %v2172
    %2175 = vmax.xlane.f32.xlu0 %v1603
    %v2176 = vpop.xlane.xlu0 %2175
    %2177 = vmax.xlane.f32.xlu0 %v1604
    %v2178 = vpop.xlane.xlu0 %2177
    %2179 = vmax.xlane.f32.xlu0 %v1612
    %v2180 = vpop.xlane.xlu0 %2179
    %2181 = vmax.xlane.f32.xlu0 %v1613
    %v2182 = vpop.xlane.xlu0 %2181
    %2183 = vmax.xlane.f32.xlu0 %v1621
    %v2184 = vpop.xlane.xlu0 %2183
    %2185 = vmax.xlane.f32.xlu0 %v1622
    %v2186 = vpop.xlane.xlu0 %2185
    %2187 = vmax.xlane.f32.xlu0 %v1630
    %v2188 = vpop.xlane.xlu0 %2187
    %2189 = vmax.xlane.f32.xlu0 %v1631
    %v2190 = vpop.xlane.xlu0 %2189
    %2191 = vmax.xlane.f32.xlu0 %v1639
    %v2192 = vpop.xlane.xlu0 %2191
    %2193 = vmax.xlane.f32.xlu0 %v1640
    %v2194 = vpop.xlane.xlu0 %2193
    %2195 = vmax.xlane.f32.xlu0 %v1648
    %v2196 = vpop.xlane.xlu0 %2195
    %2197 = vmax.xlane.f32.xlu0 %v1649
    %v2198 = vpop.xlane.xlu0 %2197
    %2199 = vmax.xlane.f32.xlu0 %v1657
    %v2200 = vpop.xlane.xlu0 %2199
    %2201 = vmax.xlane.f32.xlu0 %v1658
    %v2202 = vpop.xlane.xlu0 %2201
    %2203 = vmax.xlane.f32.xlu0 %v1666
    %v2204 = vpop.xlane.xlu0 %2203
    %2205 = vmax.xlane.f32.xlu0 %v1667
    %v2206 = vpop.xlane.xlu0 %2205
    %2207 = vmax.xlane.f32.xlu0 %v1675
    %v2208 = vpop.xlane.xlu0 %2207
    %2209 = vmax.xlane.f32.xlu0 %v1676
    %v2210 = vpop.xlane.xlu0 %2209
    %2211 = vmax.xlane.f32.xlu0 %v1684
    %v2212 = vpop.xlane.xlu0 %2211
    %2213 = vmax.xlane.f32.xlu0 %v1685
    %v2214 = vpop.xlane.xlu0 %2213
    %2215 = vmax.xlane.f32.xlu0 %v1693
    %v2216 = vpop.xlane.xlu0 %2215
    %2217 = vmax.xlane.f32.xlu0 %v1694
    %v2218 = vpop.xlane.xlu0 %2217
    %2219 = vmax.xlane.f32.xlu0 %v1702
    %v2220 = vpop.xlane.xlu0 %2219
    %2221 = vmax.xlane.f32.xlu0 %v1703
    %v2222 = vpop.xlane.xlu0 %2221
    %2223 = vmax.xlane.f32.xlu0 %v1711
    %v2224 = vpop.xlane.xlu0 %2223
    %2225 = vmax.xlane.f32.xlu0 %v1712
    %v2226 = vpop.xlane.xlu0 %2225
    %2227 = vmax.xlane.f32.xlu0 %v1720
    %v2228 = vpop.xlane.xlu0 %2227
    %2229 = vmax.xlane.f32.xlu0 %v1721
    %v2230 = vpop.xlane.xlu0 %2229
    %2231 = vmax.xlane.f32.xlu0 %v1729
    %v2232 = vpop.xlane.xlu0 %2231
    %2233 = vmax.xlane.f32.xlu0 %v1730
    %v2234 = vpop.xlane.xlu0 %2233
    %2235 = vmax.xlane.f32.xlu0 %v1738
    %v2236 = vpop.xlane.xlu0 %2235
    %2237 = vmax.xlane.f32.xlu0 %v1739
    %v2238 = vpop.xlane.xlu0 %2237
    %2239 = vmax.xlane.f32.xlu0 %v1747
    %v2240 = vpop.xlane.xlu0 %2239
    %2241 = vmax.xlane.f32.xlu0 %v1748
    %v2242 = vpop.xlane.xlu0 %2241
    %2243 = vmax.xlane.f32.xlu0 %v1756
    %v2244 = vpop.xlane.xlu0 %2243
    %2245 = vmax.xlane.f32.xlu0 %v1757
    %v2246 = vpop.xlane.xlu0 %2245
    %2247 = vmax.xlane.f32.xlu0 %v1765
    %v2248 = vpop.xlane.xlu0 %2247
    %2249 = vmax.xlane.f32.xlu0 %v1766
    %v2250 = vpop.xlane.xlu0 %2249
    %2251 = vmax.xlane.f32.xlu0 %v1774
    %v2252 = vpop.xlane.xlu0 %2251
    %2253 = vmax.xlane.f32.xlu0 %v1775
    %v2254 = vpop.xlane.xlu0 %2253
    %2255 = vmax.xlane.f32.xlu0 %v1783
    %v2256 = vpop.xlane.xlu0 %2255
    %2257 = vmax.xlane.f32.xlu0 %v1784
    %v2258 = vpop.xlane.xlu0 %2257
    %2259 = vmax.xlane.f32.xlu0 %v1792
    %v2260 = vpop.xlane.xlu0 %2259
    %2261 = vmax.xlane.f32.xlu0 %v1793
    %v2262 = vpop.xlane.xlu0 %2261
    %2263 = vmax.xlane.f32.xlu0 %v1801
    %v2264 = vpop.xlane.xlu0 %2263
    %2265 = vmax.xlane.f32.xlu0 %v1802
    %v2266 = vpop.xlane.xlu0 %2265
    %2267 = vmax.xlane.f32.xlu0 %v1810
    %v2268 = vpop.xlane.xlu0 %2267
    %2269 = vmax.xlane.f32.xlu0 %v1811
    %v2270 = vpop.xlane.xlu0 %2269
    %2271 = vmax.xlane.f32.xlu0 %v1819
    %v2272 = vpop.xlane.xlu0 %2271
    %2273 = vmax.xlane.f32.xlu0 %v1820
    %v2274 = vpop.xlane.xlu0 %2273
    %2275 = vmax.xlane.f32.xlu0 %v1828
    %v2276 = vpop.xlane.xlu0 %2275
    %2277 = vmax.xlane.f32.xlu0 %v1829
    %v2278 = vpop.xlane.xlu0 %2277
    %2279 = vmax.xlane.f32.xlu0 %v1837
    %v2280 = vpop.xlane.xlu0 %2279
    %2281 = vmax.xlane.f32.xlu0 %v1838
    %v2282 = vpop.xlane.xlu0 %2281
    %2283 = vmax.xlane.f32.xlu0 %v1846
    %v2284 = vpop.xlane.xlu0 %2283
    %2285 = vmax.xlane.f32.xlu0 %v1847
    %v2286 = vpop.xlane.xlu0 %2285
    %2287 = vmax.xlane.f32.xlu0 %v1855
    %v2288 = vpop.xlane.xlu0 %2287
    %2289 = vmax.xlane.f32.xlu0 %v1856
    %v2290 = vpop.xlane.xlu0 %2289
    %2291 = vmax.xlane.f32.xlu0 %v1864
    %v2292 = vpop.xlane.xlu0 %2291
    %2293 = vmax.xlane.f32.xlu0 %v1865
    %v2294 = vpop.xlane.xlu0 %2293
    %2295 = vmax.xlane.f32.xlu0 %v1873
    %v2296 = vpop.xlane.xlu0 %2295
    %2297 = vmax.xlane.f32.xlu0 %v1874
    %v2298 = vpop.xlane.xlu0 %2297
    %2299 = vmax.xlane.f32.xlu0 %v1882
    %v2300 = vpop.xlane.xlu0 %2299
    %2301 = vmax.xlane.f32.xlu0 %v1883
    %v2302 = vpop.xlane.xlu0 %2301
    %v2367 = vlaneseq
    %v2368 = vand.u32 %v2367, 127
    %v2369 = vlaneseq
    %v2370 = vshrl.u32 %v2369, 7
    %v2371 = vsub.s32 %v2368, %v2370
    %v2372 = vrot.slane %v2176, %v2371
    %v2373 = vadd.s32 %v2368, 4294967288
    %v2374 = vlaneseq
    %v2375 = vshrl.u32 %v2374, 7
    %v2376 = vsub.s32 %v2373, %v2375
    %v2377 = vrot.slane %v2178, %v2376
    %vm2378 = vcmask 130112
    %v2379 = vsel %vm2378, %v2377, %v2372
    %v2380 = vlaneseq
    %v2381 = vshrl.u32 %v2380, 7
    %v2382 = vsub.s32 %v2368, %v2381
    %v2383 = vrot.slane %v2180, %v2382
    %v2384 = vlaneseq
    %v2385 = vshrl.u32 %v2384, 7
    %v2386 = vsub.s32 %v2373, %v2385
    %v2387 = vrot.slane %v2182, %v2386
    %v2388 = vsel %vm2378, %v2387, %v2383
    %v2389 = vlaneseq
    %v2390 = vshrl.u32 %v2389, 7
    %v2391 = vsub.s32 %v2368, %v2390
    %v2392 = vrot.slane %v2184, %v2391
    %v2393 = vlaneseq
    %v2394 = vshrl.u32 %v2393, 7
    %v2395 = vsub.s32 %v2373, %v2394
    %v2396 = vrot.slane %v2186, %v2395
    %v2397 = vsel %vm2378, %v2396, %v2392
    %v2398 = vlaneseq
    %v2399 = vshrl.u32 %v2398, 7
    %v2400 = vsub.s32 %v2368, %v2399
    %v2401 = vrot.slane %v2188, %v2400
    %v2402 = vlaneseq
    %v2403 = vshrl.u32 %v2402, 7
    %v2404 = vsub.s32 %v2373, %v2403
    %v2405 = vrot.slane %v2190, %v2404
    %v2406 = vsel %vm2378, %v2405, %v2401
    %v2407 = vlaneseq
    %v2408 = vshrl.u32 %v2407, 7
    %v2409 = vsub.s32 %v2368, %v2408
    %v2410 = vrot.slane %v2192, %v2409
    %v2411 = vlaneseq
    %v2412 = vshrl.u32 %v2411, 7
    %v2413 = vsub.s32 %v2373, %v2412
    %v2414 = vrot.slane %v2194, %v2413
    %v2415 = vsel %vm2378, %v2414, %v2410
    %v2416 = vlaneseq
    %v2417 = vshrl.u32 %v2416, 7
    %v2418 = vsub.s32 %v2368, %v2417
    %v2419 = vrot.slane %v2196, %v2418
    %v2420 = vlaneseq
    %v2421 = vshrl.u32 %v2420, 7
    %v2422 = vsub.s32 %v2373, %v2421
    %v2423 = vrot.slane %v2198, %v2422
    %v2424 = vsel %vm2378, %v2423, %v2419
    %v2425 = vlaneseq
    %v2426 = vshrl.u32 %v2425, 7
    %v2427 = vsub.s32 %v2368, %v2426
    %v2428 = vrot.slane %v2200, %v2427
    %v2429 = vlaneseq
    %v2430 = vshrl.u32 %v2429, 7
    %v2431 = vsub.s32 %v2373, %v2430
    %v2432 = vrot.slane %v2202, %v2431
    %v2433 = vsel %vm2378, %v2432, %v2428
    %v2434 = vlaneseq
    %v2435 = vshrl.u32 %v2434, 7
    %v2436 = vsub.s32 %v2368, %v2435
    %v2437 = vrot.slane %v2204, %v2436
    %v2438 = vlaneseq
    %v2439 = vshrl.u32 %v2438, 7
    %v2440 = vsub.s32 %v2373, %v2439
    %v2441 = vrot.slane %v2206, %v2440
    %v2442 = vsel %vm2378, %v2441, %v2437
    %v2443 = vlaneseq
    %v2444 = vshrl.u32 %v2443, 7
    %v2445 = vsub.s32 %v2368, %v2444
    %v2446 = vrot.slane %v2208, %v2445
    %v2447 = vlaneseq
    %v2448 = vshrl.u32 %v2447, 7
    %v2449 = vsub.s32 %v2373, %v2448
    %v2450 = vrot.slane %v2210, %v2449
    %v2451 = vsel %vm2378, %v2450, %v2446
    %v2452 = vlaneseq
    %v2453 = vshrl.u32 %v2452, 7
    %v2454 = vsub.s32 %v2368, %v2453
    %v2455 = vrot.slane %v2212, %v2454
    %v2456 = vlaneseq
    %v2457 = vshrl.u32 %v2456, 7
    %v2458 = vsub.s32 %v2373, %v2457
    %v2459 = vrot.slane %v2214, %v2458
    %v2460 = vsel %vm2378, %v2459, %v2455
    %v2461 = vlaneseq
    %v2462 = vshrl.u32 %v2461, 7
    %v2463 = vsub.s32 %v2368, %v2462
    %v2464 = vrot.slane %v2216, %v2463
    %v2465 = vlaneseq
    %v2466 = vshrl.u32 %v2465, 7
    %v2467 = vsub.s32 %v2373, %v2466
    %v2468 = vrot.slane %v2218, %v2467
    %v2469 = vsel %vm2378, %v2468, %v2464
    %v2470 = vlaneseq
    %v2471 = vshrl.u32 %v2470, 7
    %v2472 = vsub.s32 %v2368, %v2471
    %v2473 = vrot.slane %v2220, %v2472
    %v2474 = vlaneseq
    %v2475 = vshrl.u32 %v2474, 7
    %v2476 = vsub.s32 %v2373, %v2475
    %v2477 = vrot.slane %v2222, %v2476
    %v2478 = vsel %vm2378, %v2477, %v2473
    %v2479 = vlaneseq
    %v2480 = vshrl.u32 %v2479, 7
    %v2481 = vsub.s32 %v2368, %v2480
    %v2482 = vrot.slane %v2224, %v2481
    %v2483 = vlaneseq
    %v2484 = vshrl.u32 %v2483, 7
    %v2485 = vsub.s32 %v2373, %v2484
    %v2486 = vrot.slane %v2226, %v2485
    %v2487 = vsel %vm2378, %v2486, %v2482
    %v2488 = vlaneseq
    %v2489 = vshrl.u32 %v2488, 7
    %v2490 = vsub.s32 %v2368, %v2489
    %v2491 = vrot.slane %v2228, %v2490
    %v2492 = vlaneseq
    %v2493 = vshrl.u32 %v2492, 7
    %v2494 = vsub.s32 %v2373, %v2493
    %v2495 = vrot.slane %v2230, %v2494
    %v2496 = vsel %vm2378, %v2495, %v2491
    %v2497 = vlaneseq
    %v2498 = vshrl.u32 %v2497, 7
    %v2499 = vsub.s32 %v2368, %v2498
    %v2500 = vrot.slane %v2232, %v2499
    %v2501 = vlaneseq
    %v2502 = vshrl.u32 %v2501, 7
    %v2503 = vsub.s32 %v2373, %v2502
    %v2504 = vrot.slane %v2234, %v2503
    %v2505 = vsel %vm2378, %v2504, %v2500
    %v2506 = vlaneseq
    %v2507 = vshrl.u32 %v2506, 7
    %v2508 = vsub.s32 %v2368, %v2507
    %v2509 = vrot.slane %v2236, %v2508
    %v2510 = vlaneseq
    %v2511 = vshrl.u32 %v2510, 7
    %v2512 = vsub.s32 %v2373, %v2511
    %v2513 = vrot.slane %v2238, %v2512
    %v2514 = vsel %vm2378, %v2513, %v2509
    %v2515 = vlaneseq
    %v2516 = vshrl.u32 %v2515, 7
    %v2517 = vsub.s32 %v2368, %v2516
    %v2518 = vrot.slane %v2240, %v2517
    %v2519 = vlaneseq
    %v2520 = vshrl.u32 %v2519, 7
    %v2521 = vsub.s32 %v2373, %v2520
    %v2522 = vrot.slane %v2242, %v2521
    %v2523 = vsel %vm2378, %v2522, %v2518
    %v2524 = vlaneseq
    %v2525 = vshrl.u32 %v2524, 7
    %v2526 = vsub.s32 %v2368, %v2525
    %v2527 = vrot.slane %v2244, %v2526
    %v2528 = vlaneseq
    %v2529 = vshrl.u32 %v2528, 7
    %v2530 = vsub.s32 %v2373, %v2529
    %v2531 = vrot.slane %v2246, %v2530
    %v2532 = vsel %vm2378, %v2531, %v2527
    %v2533 = vlaneseq
    %v2534 = vshrl.u32 %v2533, 7
    %v2535 = vsub.s32 %v2368, %v2534
    %v2536 = vrot.slane %v2248, %v2535
    %v2537 = vlaneseq
    %v2538 = vshrl.u32 %v2537, 7
    %v2539 = vsub.s32 %v2373, %v2538
    %v2540 = vrot.slane %v2250, %v2539
    %v2541 = vsel %vm2378, %v2540, %v2536
    %v2542 = vlaneseq
    %v2543 = vshrl.u32 %v2542, 7
    %v2544 = vsub.s32 %v2368, %v2543
    %v2545 = vrot.slane %v2252, %v2544
    %v2546 = vlaneseq
    %v2547 = vshrl.u32 %v2546, 7
    %v2548 = vsub.s32 %v2373, %v2547
    %v2549 = vrot.slane %v2254, %v2548
    %v2550 = vsel %vm2378, %v2549, %v2545
    %v2551 = vlaneseq
    %v2552 = vshrl.u32 %v2551, 7
    %v2553 = vsub.s32 %v2368, %v2552
    %v2554 = vrot.slane %v2256, %v2553
    %v2555 = vlaneseq
    %v2556 = vshrl.u32 %v2555, 7
    %v2557 = vsub.s32 %v2373, %v2556
    %v2558 = vrot.slane %v2258, %v2557
    %v2559 = vsel %vm2378, %v2558, %v2554
    %v2560 = vlaneseq
    %v2561 = vshrl.u32 %v2560, 7
    %v2562 = vsub.s32 %v2368, %v2561
    %v2563 = vrot.slane %v2260, %v2562
    %v2564 = vlaneseq
    %v2565 = vshrl.u32 %v2564, 7
    %v2566 = vsub.s32 %v2373, %v2565
    %v2567 = vrot.slane %v2262, %v2566
    %v2568 = vsel %vm2378, %v2567, %v2563
    %v2569 = vlaneseq
    %v2570 = vshrl.u32 %v2569, 7
    %v2571 = vsub.s32 %v2368, %v2570
    %v2572 = vrot.slane %v2264, %v2571
    %v2573 = vlaneseq
    %v2574 = vshrl.u32 %v2573, 7
    %v2575 = vsub.s32 %v2373, %v2574
    %v2576 = vrot.slane %v2266, %v2575
    %v2577 = vsel %vm2378, %v2576, %v2572
    %v2578 = vlaneseq
    %v2579 = vshrl.u32 %v2578, 7
    %v2580 = vsub.s32 %v2368, %v2579
    %v2581 = vrot.slane %v2268, %v2580
    %v2582 = vlaneseq
    %v2583 = vshrl.u32 %v2582, 7
    %v2584 = vsub.s32 %v2373, %v2583
    %v2585 = vrot.slane %v2270, %v2584
    %v2586 = vsel %vm2378, %v2585, %v2581
    %v2587 = vlaneseq
    %v2588 = vshrl.u32 %v2587, 7
    %v2589 = vsub.s32 %v2368, %v2588
    %v2590 = vrot.slane %v2272, %v2589
    %v2591 = vlaneseq
    %v2592 = vshrl.u32 %v2591, 7
    %v2593 = vsub.s32 %v2373, %v2592
    %v2594 = vrot.slane %v2274, %v2593
    %v2595 = vsel %vm2378, %v2594, %v2590
    %v2596 = vlaneseq
    %v2597 = vshrl.u32 %v2596, 7
    %v2598 = vsub.s32 %v2368, %v2597
    %v2599 = vrot.slane %v2276, %v2598
    %v2600 = vlaneseq
    %v2601 = vshrl.u32 %v2600, 7
    %v2602 = vsub.s32 %v2373, %v2601
    %v2603 = vrot.slane %v2278, %v2602
    %v2604 = vsel %vm2378, %v2603, %v2599
    %v2605 = vlaneseq
    %v2606 = vshrl.u32 %v2605, 7
    %v2607 = vsub.s32 %v2368, %v2606
    %v2608 = vrot.slane %v2280, %v2607
    %v2609 = vlaneseq
    %v2610 = vshrl.u32 %v2609, 7
    %v2611 = vsub.s32 %v2373, %v2610
    %v2612 = vrot.slane %v2282, %v2611
    %v2613 = vsel %vm2378, %v2612, %v2608
    %v2614 = vlaneseq
    %v2615 = vshrl.u32 %v2614, 7
    %v2616 = vsub.s32 %v2368, %v2615
    %v2617 = vrot.slane %v2284, %v2616
    %v2618 = vlaneseq
    %v2619 = vshrl.u32 %v2618, 7
    %v2620 = vsub.s32 %v2373, %v2619
    %v2621 = vrot.slane %v2286, %v2620
    %v2622 = vsel %vm2378, %v2621, %v2617
    %v2623 = vlaneseq
    %v2624 = vshrl.u32 %v2623, 7
    %v2625 = vsub.s32 %v2368, %v2624
    %v2626 = vrot.slane %v2288, %v2625
    %v2627 = vlaneseq
    %v2628 = vshrl.u32 %v2627, 7
    %v2629 = vsub.s32 %v2373, %v2628
    %v2630 = vrot.slane %v2290, %v2629
    %v2631 = vsel %vm2378, %v2630, %v2626
    %v2632 = vlaneseq
    %v2633 = vshrl.u32 %v2632, 7
    %v2634 = vsub.s32 %v2368, %v2633
    %v2635 = vrot.slane %v2292, %v2634
    %v2636 = vlaneseq
    %v2637 = vshrl.u32 %v2636, 7
    %v2638 = vsub.s32 %v2373, %v2637
    %v2639 = vrot.slane %v2294, %v2638
    %v2640 = vsel %vm2378, %v2639, %v2635
    %v2641 = vlaneseq
    %v2642 = vshrl.u32 %v2641, 7
    %v2643 = vsub.s32 %v2368, %v2642
    %v2644 = vrot.slane %v2296, %v2643
    %v2645 = vlaneseq
    %v2646 = vshrl.u32 %v2645, 7
    %v2647 = vsub.s32 %v2373, %v2646
    %v2648 = vrot.slane %v2298, %v2647
    %v2649 = vsel %vm2378, %v2648, %v2644
    %v2650 = vlaneseq
    %v2651 = vshrl.u32 %v2650, 7
    %v2652 = vsub.s32 %v2368, %v2651
    %v2653 = vrot.slane %v2300, %v2652
    %v2654 = vlaneseq
    %v2655 = vshrl.u32 %v2654, 7
    %v2656 = vsub.s32 %v2373, %v2655
    %v2657 = vrot.slane %v2302, %v2656
    %v2658 = vsel %vm2378, %v2657, %v2653
    %v2659 = vsel %vm328, %v2388, %v2379
    %v2660 = vsel %vm322, %v2397, %v2659
    %v2661 = vsel %vm330, %v2406, %v2660
    %v2662 = vsel %vm323, %v2415, %v2661
    %v2663 = vsel %vm332, %v2424, %v2662
    %v2664 = vsel %vm325, %v2433, %v2663
    %v2665 = vsel %vm334, %v2442, %v2664
    %v2666 = vsel %vm328, %v2460, %v2451
    %v2667 = vsel %vm322, %v2469, %v2666
    %v2668 = vsel %vm330, %v2478, %v2667
    %v2669 = vsel %vm323, %v2487, %v2668
    %v2670 = vsel %vm332, %v2496, %v2669
    %v2671 = vsel %vm325, %v2505, %v2670
    %v2672 = vsel %vm334, %v2514, %v2671
    %v2673 = vsel %vm328, %v2532, %v2523
    %v2674 = vsel %vm322, %v2541, %v2673
    %v2675 = vsel %vm330, %v2550, %v2674
    %v2676 = vsel %vm323, %v2559, %v2675
    %v2677 = vsel %vm332, %v2568, %v2676
    %v2678 = vsel %vm325, %v2577, %v2677
    %v2679 = vsel %vm334, %v2586, %v2678
    %v2680 = vsel %vm328, %v2604, %v2595
    %v2681 = vsel %vm322, %v2613, %v2680
    %v2682 = vsel %vm330, %v2622, %v2681
    %v2683 = vsel %vm323, %v2631, %v2682
    %v2684 = vsel %vm332, %v2640, %v2683
    %v2685 = vsel %vm325, %v2649, %v2684
    %v2686 = vsel %vm334, %v2658, %v2685
    %v2691 = vcombine.high %v2665, 0.0
    %v2693 = vunpack.c.l.s4 1983009808
    %v2694 = vunpack.c.0.s8 %v2693
    %v2695 = vlaneseq
    %v2696 = vshrl.u32 %v2695, 7
    %v2697 = vsub.s32 %v2694, %v2696
    %v2698 = vrot.slane %v2665, %v2697
    %v2700 = vunpack.c.l.s4 1983009808
    %v2701 = vunpack.c.0.s8 %v2700
    %v2702 = vlaneseq
    %v2703 = vshrl.u32 %v2702, 7
    %v2704 = vsub.s32 %v2701, %v2703
    %v2705 = vrot.slane %v2691, %v2704
    %v2706 = vcombine.high %v2679, 0.0
    %v2708 = vunpack.c.l.s4 1983009808
    %v2709 = vunpack.c.0.s8 %v2708
    %v2710 = vlaneseq
    %v2711 = vshrl.u32 %v2710, 7
    %v2712 = vsub.s32 %v2709, %v2711
    %v2713 = vrot.slane %v2679, %v2712
    %v2715 = vunpack.c.l.s4 1983009808
    %v2716 = vunpack.c.0.s8 %v2715
    %v2717 = vlaneseq
    %v2718 = vshrl.u32 %v2717, 7
    %v2719 = vsub.s32 %v2716, %v2718
    %v2720 = vrot.slane %v2706, %v2719
    %v2721 = vcombine.low %v2698, %v2713
    %v2722 = vcombine.high %v2698, %v2713
    %v2724 = vunpack.c.l.s4 1934713408
    %v2725 = vunpack.c.0.s8 %v2724
    %v2726 = vlaneseq
    %v2727 = vshrl.u32 %v2726, 7
    %v2728 = vsub.s32 %v2725, %v2727
    %v2729 = vrot.slane %v2721, %v2728
    %v2731 = vunpack.c.l.s4 1934713408
    %v2732 = vunpack.c.0.s8 %v2731
    %v2733 = vlaneseq
    %v2734 = vshrl.u32 %v2733, 7
    %v2735 = vsub.s32 %v2732, %v2734
    %v2736 = vrot.slane %v2722, %v2735
    %v2737 = vcombine.low %v2705, %v2720
    %v2738 = vcombine.high %v2705, %v2720
    %v2740 = vunpack.c.l.s4 1934713408
    %v2741 = vunpack.c.0.s8 %v2740
    %v2742 = vlaneseq
    %v2743 = vshrl.u32 %v2742, 7
    %v2744 = vsub.s32 %v2741, %v2743
    %v2745 = vrot.slane %v2737, %v2744
    %v2747 = vunpack.c.l.s4 1934713408
    %v2748 = vunpack.c.0.s8 %v2747
    %v2749 = vlaneseq
    %v2750 = vshrl.u32 %v2749, 7
    %v2751 = vsub.s32 %v2748, %v2750
    %v2752 = vrot.slane %v2738, %v2751
    %v2753 = vcombine.high %v2729, 0.0
    %v2754 = vcombine.high %v2736, 0.0
    %v2755 = vcombine.high %v2745, 0.0
    %v2756 = vcombine.high %v2752, 0.0
    %v2757 = vcombine.high %v2672, 0.0
    %v2759 = vunpack.c.l.s4 1983009808
    %v2760 = vunpack.c.0.s8 %v2759
    %v2761 = vlaneseq
    %v2762 = vshrl.u32 %v2761, 7
    %v2763 = vsub.s32 %v2760, %v2762
    %v2764 = vrot.slane %v2672, %v2763
    %v2766 = vunpack.c.l.s4 1983009808
    %v2767 = vunpack.c.0.s8 %v2766
    %v2768 = vlaneseq
    %v2769 = vshrl.u32 %v2768, 7
    %v2770 = vsub.s32 %v2767, %v2769
    %v2771 = vrot.slane %v2757, %v2770
    %v2772 = vcombine.high %v2686, 0.0
    %v2774 = vunpack.c.l.s4 1983009808
    %v2775 = vunpack.c.0.s8 %v2774
    %v2776 = vlaneseq
    %v2777 = vshrl.u32 %v2776, 7
    %v2778 = vsub.s32 %v2775, %v2777
    %v2779 = vrot.slane %v2686, %v2778
    %v2781 = vunpack.c.l.s4 1983009808
    %v2782 = vunpack.c.0.s8 %v2781
    %v2783 = vlaneseq
    %v2784 = vshrl.u32 %v2783, 7
    %v2785 = vsub.s32 %v2782, %v2784
    %v2786 = vrot.slane %v2772, %v2785
    %v2787 = vcombine.low %v2764, %v2779
    %v2788 = vcombine.high %v2764, %v2779
    %v2790 = vunpack.c.l.s4 1934713408
    %v2791 = vunpack.c.0.s8 %v2790
    %v2792 = vlaneseq
    %v2793 = vshrl.u32 %v2792, 7
    %v2794 = vsub.s32 %v2791, %v2793
    %v2795 = vrot.slane %v2787, %v2794
    %v2797 = vunpack.c.l.s4 1934713408
    %v2798 = vunpack.c.0.s8 %v2797
    %v2799 = vlaneseq
    %v2800 = vshrl.u32 %v2799, 7
    %v2801 = vsub.s32 %v2798, %v2800
    %v2802 = vrot.slane %v2788, %v2801
    %v2803 = vcombine.low %v2771, %v2786
    %v2804 = vcombine.high %v2771, %v2786
    %v2806 = vunpack.c.l.s4 1934713408
    %v2807 = vunpack.c.0.s8 %v2806
    %v2808 = vlaneseq
    %v2809 = vshrl.u32 %v2808, 7
    %v2810 = vsub.s32 %v2807, %v2809
    %v2811 = vrot.slane %v2803, %v2810
    %v2813 = vunpack.c.l.s4 1934713408
    %v2814 = vunpack.c.0.s8 %v2813
    %v2815 = vlaneseq
    %v2816 = vshrl.u32 %v2815, 7
    %v2817 = vsub.s32 %v2814, %v2816
    %v2818 = vrot.slane %v2804, %v2817
    %v2819 = vcombine.high %v2795, 0.0
    %v2820 = vcombine.high %v2802, 0.0
    %v2821 = vcombine.high %v2811, 0.0
    %v2822 = vcombine.high %v2818, 0.0
    %2824 = vrot.lane.b32.xlu0 %v2753, 16
    %v2825 = vpop.permute.xlu0 %2824
    %2828 = vrot.lane.b32.xlu0 %v2736, 32
    %v2829 = vpop.permute.xlu0 %2828
    %2832 = vrot.lane.b32.xlu0 %v2754, 48
    %v2833 = vpop.permute.xlu0 %2832
    %2836 = vrot.lane.b32.xlu0 %v2745, 64
    %v2837 = vpop.permute.xlu0 %2836
    %2840 = vrot.lane.b32.xlu0 %v2755, 80
    %v2841 = vpop.permute.xlu0 %2840
    %2844 = vrot.lane.b32.xlu0 %v2752, 96
    %v2845 = vpop.permute.xlu0 %2844
    %2848 = vrot.lane.b32.xlu0 %v2756, 112
    %v2849 = vpop.permute.xlu0 %2848
    %2852 = vrot.lane.b32.xlu0 %v2819, 16
    %v2853 = vpop.permute.xlu0 %2852
    %2856 = vrot.lane.b32.xlu0 %v2802, 32
    %v2857 = vpop.permute.xlu0 %2856
    %2860 = vrot.lane.b32.xlu0 %v2820, 48
    %v2861 = vpop.permute.xlu0 %2860
    %2864 = vrot.lane.b32.xlu0 %v2811, 64
    %v2865 = vpop.permute.xlu0 %2864
    %2868 = vrot.lane.b32.xlu0 %v2821, 80
    %v2869 = vpop.permute.xlu0 %2868
    %2872 = vrot.lane.b32.xlu0 %v2818, 96
    %v2873 = vpop.permute.xlu0 %2872
    %2876 = vrot.lane.b32.xlu0 %v2822, 112
    %v2877 = vpop.permute.xlu0 %2876
    %v2879 = vsel %vm1602, %v2729, %v2825
    %v2880 = vsel %vm2144, %v2879, %v2829
    %v2881 = vsel %vm2146, %v2880, %v2833
    %v2882 = vsel %vm2148, %v2881, %v2837
    %v2883 = vsel %vm2150, %v2882, %v2841
    %v2884 = vsel %vm2152, %v2883, %v2845
    %v2885 = vsel %vm2154, %v2884, %v2849
    %v2886 = vsel %vm1602, %v2795, %v2853
    %v2887 = vsel %vm2144, %v2886, %v2857
    %v2888 = vsel %vm2146, %v2887, %v2861
    %v2889 = vsel %vm2148, %v2888, %v2865
    %v2890 = vsel %vm2150, %v2889, %v2869
    %v2891 = vsel %vm2152, %v2890, %v2873
    %v2892 = vsel %vm2154, %v2891, %v2877
    %v2895 = vcombine.low %v2885, %v2892
    %v2897 = vunpack.c.l.s4 1983009808
    %v2898 = vunpack.c.0.s8 %v2897
    %v2899 = vlaneseq
    %v2900 = vshrl.u32 %v2899, 7
    %v2901 = vsub.s32 %v2898, %v2900
    %v2902 = vrot.slane %v2895, %v2901
    %2904 = vst [vmem:[#allocation10] sm:$0xf] %v2902
    // Predicated region
    $region18: #{tpu_custom_call.1} parent=1 // pred_check
      _
    $region19: #{tpu_custom_call.1} parent=1 // pred_check_branch
      %2906 = sbr.rel (0) target = $region21
    $region20: #{tpu_custom_call.1} parent=1 // pred_region
      %s2908 = ssub.s32 64, 64
      %2909 = vsyncadd [#allocation4], %s2908
      %s2911 = sshll.u32 [#allocation7], 4
      %s2912 = int_to_ptr.vmem [resolvable:$true] %s2911
      %2914 = dma.vmem_to_hbm [thread:$0]  %s2912, 64, %s2, [#allocation4]
    $region21: #{tpu_custom_call.1} parent=1 // pred_fallthru
      _
    // Predicated region
    $region22: #{tpu_custom_call.1} parent=1 // pred_check
      _
    $region23: #{tpu_custom_call.1} parent=1 // pred_check_branch
      %2916 = sbr.rel (0) target = $region25
    $region24: #{tpu_custom_call.1} parent=1 // pred_region
      %s2918 = ssub.s32 64, 64
      %2919 = vsyncadd [#allocation9], %s2918
      %s2921 = sshll.u32 [#allocation8], 4
      %s2922 = int_to_ptr.vmem [resolvable:$true] %s2921
      %2924 = dma.vmem_to_hbm [thread:$0]  %s2922, 64, %s3, [#allocation9]
    $region25: #{tpu_custom_call.1} parent=1 // pred_fallthru
      _
    // Predicated region
    $region26: #{tpu_custom_call.1} parent=1 // pred_check
      _
    $region27: #{tpu_custom_call.1} parent=1 // pred_check_branch
      %2926 = sbr.rel (0) target = $region29
    $region28: #{tpu_custom_call.1} parent=1 // pred_region
      %s2928 = ssub.s32 64, 64
      %2929 = vsyncadd [#allocation9], %s2928
      %s2931 = sshll.u32 [#allocation10], 4
      %s2932 = int_to_ptr.vmem [resolvable:$true] %s2931
      %2934 = dma.vmem_to_hbm [thread:$0]  %s2932, 64, %s4, [#allocation9]
    $region29: #{tpu_custom_call.1} parent=1 // pred_fallthru
      _
    // Predicated region
    $region30: #{tpu_custom_call.1} parent=1 // pred_check
      _
    $region31: #{tpu_custom_call.1} parent=1 // pred_check_branch
      %2936 = sbr.rel (0) target = $region33
    $region32: #{tpu_custom_call.1} parent=1 // pred_region
      %2937 = dma.done [#allocation4], 64
    $region33: #{tpu_custom_call.1} parent=1 // pred_fallthru
      _
    // Predicated region
    $region34: #{tpu_custom_call.1} parent=1 // pred_check
      _
    $region35: #{tpu_custom_call.1} parent=1 // pred_check_branch
      %2939 = sbr.rel (0) target = $region37
    $region36: #{tpu_custom_call.1} parent=1 // pred_region
      %2940 = dma.done [#allocation9], 64
    $region37: #{tpu_custom_call.1} parent=1 // pred_fallthru
      _
    // Predicated region
    $region38: #{tpu_custom_call.1} parent=1 // pred_check
      _
    $region39: #{tpu_custom_call.1} parent=1 // pred_check_branch
      %2942 = sbr.rel (0) target = $region41
    $region40: #{tpu_custom_call.1} parent=1 // pred_region
      %2943 = dma.done [#allocation9], 64
    $region41: #{tpu_custom_call.1} parent=1 // pred_fallthru
      _
    %2944 = vsyncpa [#allocation3], 1
    %2945 = vsyncpa [#allocation6], 1
    %2946 = vsyncpa [#allocation4], 1
    %2947 = vsyncpa [#allocation9], 1

</llo_original>
